<compile_context>
chip_gen: v7x
topology: tpu7x:2x2x1
jax: 0.10.0
libtpu: 0.0.40
codegen_flags: <defaults>
</compile_context>

<pallas_src>
import functools
import math

import jax
import jax.numpy as jnp
from jax.experimental import pallas as pl
from jax.experimental.pallas import tpu as pltpu


def gsa_kernel(num_heads,
               xq_ref, xf_ref,
               wq_ref, wk_ref, wv_ref, bq_ref, bk_ref, bv_ref,
               wo_ref, bo_ref, gamma_ref, beta_ref,
               out_ref, scores_ref,
               k_scr, v_scr):
    qi = pl.program_id(1)
    H = num_heads
    tq = xq_ref.shape[1]
    S = xf_ref.shape[1]
    D = xq_ref.shape[2]
    hd = D // H
    scale = 1.0 / math.sqrt(hd)

    # ---- K / V projection of the full sequence, once per batch ----
    # (qi grid axis is "arbitrary" => sequential, so the scratch filled at
    #  qi == 0 is valid for every later query tile of this batch.)
    @pl.when(qi == 0)
    def _():
        xf = xf_ref[0].astype(jnp.bfloat16)                          # (S, D)
        k = jnp.dot(xf, wk_ref[...],
                    preferred_element_type=jnp.float32) + bk_ref[...]
        v = jnp.dot(xf, wv_ref[...],
                    preferred_element_type=jnp.float32) + bv_ref[...]
        # store head-major so the per-tile attention needs no K/V transpose
        k_scr[...] = k.reshape(S, H, hd).transpose(1, 0, 2).astype(jnp.bfloat16)
        v_scr[...] = v.reshape(S, H, hd).transpose(1, 0, 2).astype(jnp.bfloat16)

    # ---- Q projection for this query tile (1/sqrt(hd) folded into q) ----
    xq = xq_ref[0]                                                   # (tq, D) f32
    q = jnp.dot(xq.astype(jnp.bfloat16), wq_ref[...],
                preferred_element_type=jnp.float32) + bq_ref[...]
    q = q * scale
    qh = q.reshape(tq, H, hd).transpose(1, 0, 2).astype(jnp.bfloat16)  # (H, tq, hd)

    # ---- attention scores + numerically stable softmax (f32) ----
    s = jnp.einsum('hqd,hkd->hqk', qh, k_scr[...],
                   preferred_element_type=jnp.float32)               # (H, tq, S)
    s = s - jnp.max(s, axis=-1, keepdims=True)
    p = jnp.exp(s)
    p = p * pl.reciprocal(jnp.sum(p, axis=-1, keepdims=True), approx=True)

    # ---- attention output + output projection ----
    o = jnp.einsum('hqk,hkd->hqd', p.astype(jnp.bfloat16), v_scr[...],
                   preferred_element_type=jnp.float32)               # (H, tq, hd)
    o = o.transpose(1, 0, 2).reshape(tq, D)
    attn_out = jnp.dot(o.astype(jnp.bfloat16), wo_ref[...],
                       preferred_element_type=jnp.float32) + bo_ref[...]

    # ---- AddNorm: LayerNorm(x + attn_out), eps = 1e-5 ----
    y = xq.astype(jnp.float32) + attn_out
    mu = jnp.mean(y, axis=-1, keepdims=True)
    var = jnp.mean((y - mu) ** 2, axis=-1, keepdims=True)
    yn = (y - mu) * jax.lax.rsqrt(var + 1e-5)
    out_ref[0] = (yn * gamma_ref[...] + beta_ref[...]).astype(out_ref.dtype)

    # attention weights averaged over heads (PyTorch average_attn_weights=True)
    scores_ref[0] = jnp.mean(p, axis=0).astype(scores_ref.dtype)


def global_self_attention(x, params, num_heads, *, q_tile=128):
    """x: (B, S, D) f32. Returns (out (B,S,D), attn_scores (B,S,S)).

    q_tile: query tile size (use ~256 on v6e, 128 on v5e/v7x)."""
    B, S, D = x.shape
    assert D % num_heads == 0
    hd = D // num_heads
    tq = S if S <= q_tile else q_tile          # block dim must be %8==0 or ==S
    nq = pl.cdiv(S, tq)

    bf16, f32 = jnp.bfloat16, jnp.float32
    # MXU operands live in bf16 (f32 accumulation inside the kernel).
    wq_t = params["wq_t"].astype(bf16)
    wk_t = params["wk_t"].astype(bf16)
    wv_t = params["wv_t"].astype(bf16)
    wo_t = params["wo_t"].astype(bf16)
    bq, bk, bv = (params[k].astype(f32) for k in ("bq", "bk", "bv"))
    bo = params["bo"].astype(f32)
    gamma, beta = params["gamma"].astype(f32), params["beta"].astype(f32)

    kernel = functools.partial(gsa_kernel, num_heads)

    wspec = pl.BlockSpec((D, D), lambda b, qi: (0, 0))     # resident weights
    vspec = pl.BlockSpec((1, D), lambda b, qi: (0, 0))     # resident bias / norm

    flops = int(B * (8 * S * D * D + 4 * S * S * D))       # QKV+out proj + attn
    transcendentals = int(B * num_heads * S * S)           # exp
    bytes_accessed = int(2 * B * S * D * 4 + 4 * D * D * 2 + 7 * D * 4
                         + B * S * D * 4 + B * S * S * 4)

    out, scores = pl.pallas_call(
        kernel,
        out_shape=(
            jax.ShapeDtypeStruct((B, S, D), x.dtype),
            jax.ShapeDtypeStruct((B, S, S), jnp.float32),
        ),
        grid_spec=pltpu.PrefetchScalarGridSpec(
            num_scalar_prefetch=0,
            grid=(B, nq),
            in_specs=[
                pl.BlockSpec((1, tq, D), lambda b, qi: (b, qi, 0)),  # x query tile
                pl.BlockSpec((1, S, D), lambda b, qi: (b, 0, 0)),    # x full (K/V)
                wspec, wspec, wspec,             # Wq^T, Wk^T, Wv^T  (bf16)
                vspec, vspec, vspec,             # bq, bk, bv
                wspec, vspec,                    # Wo^T (bf16), bo
                vspec, vspec,                    # gamma, beta
            ],
            out_specs=[
                pl.BlockSpec((1, tq, D), lambda b, qi: (b, qi, 0)),
                pl.BlockSpec((1, tq, S), lambda b, qi: (b, qi, 0)),
            ],
            scratch_shapes=[
                pltpu.VMEM((num_heads, S, hd), bf16),   # K, head-major, per batch
                pltpu.VMEM((num_heads, S, hd), bf16),   # V, head-major, per batch
            ],
        ),
        compiler_params=pltpu.CompilerParams(
            # batch axis sharded across TensorCores; qi must stay sequential
            # because the K/V scratch filled at qi==0 is reused by later tiles.
            dimension_semantics=("parallel", "arbitrary"),
            vmem_limit_bytes=64 * 1024 * 1024,
        ),
        cost_estimate=pl.CostEstimate(
            flops=flops, transcendentals=transcendentals,
            bytes_accessed=bytes_accessed),
    )(x, x, wq_t, wk_t, wv_t, bq, bk, bv, wo_t, bo, gamma, beta)
    return out, scores


def init_params(key, d_model):
    """Synthetic init matching nn.MultiheadAttention + nn.LayerNorm parameter
    shapes (in_proj (3D,D), out_proj (D,D), norm (D,)). Weights stored bf16."""
    k1, k2, k3, k4 = jax.random.split(key, 4)
    scale = 1.0 / jnp.sqrt(jnp.float32(d_model))
    in_proj_w = jax.random.uniform(k1, (3 * d_model, d_model),
                                   minval=-scale, maxval=scale, dtype=jnp.float32)
    in_proj_b = jax.random.uniform(k2, (3 * d_model,),
                                   minval=-scale, maxval=scale, dtype=jnp.float32)
    wq, wk, wv = jnp.split(in_proj_w, 3, axis=0)
    bq, bk, bv = jnp.split(in_proj_b, 3, axis=0)
    out_proj_w = jax.random.uniform(k3, (d_model, d_model),
                                    minval=-scale, maxval=scale, dtype=jnp.float32)
    out_proj_b = jax.random.uniform(k4, (d_model,),
                                    minval=-scale, maxval=scale, dtype=jnp.float32)
    return {
        "wq_t": wq.T.astype(jnp.bfloat16),
        "wk_t": wk.T.astype(jnp.bfloat16),
        "wv_t": wv.T.astype(jnp.bfloat16),
        "bq": bq.reshape(1, -1), "bk": bk.reshape(1, -1), "bv": bv.reshape(1, -1),
        "wo_t": out_proj_w.T.astype(jnp.bfloat16),
        "bo": out_proj_b.reshape(1, -1),
        "gamma": jnp.ones((1, d_model), jnp.float32),   # LayerNorm weight = 1
        "beta": jnp.zeros((1, d_model), jnp.float32),   # LayerNorm bias  = 0
    }


def reference(x, params, num_heads):
    """Pure-JAX f32 reference (same bf16-quantized weights) for sanity check."""
    f32 = jnp.float32
    B, S, D = x.shape
    H = num_heads
    hd = D // H
    wq, wk, wv, wo = (params[k].astype(f32)
                      for k in ("wq_t", "wk_t", "wv_t", "wo_t"))
    bq, bk, bv, bo = (params[k].astype(f32) for k in ("bq", "bk", "bv", "bo"))
    gamma, beta = params["gamma"].astype(f32), params["beta"].astype(f32)
    q = x @ wq + bq
    k = x @ wk + bk
    v = x @ wv + bv
    qh = q.reshape(B, S, H, hd).transpose(0, 2, 1, 3)
    kh = k.reshape(B, S, H, hd).transpose(0, 2, 1, 3)
    vh = v.reshape(B, S, H, hd).transpose(0, 2, 1, 3)
    s = jnp.einsum("bhqd,bhkd->bhqk", qh, kh) / jnp.sqrt(jnp.float32(hd))
    p = jax.nn.softmax(s, axis=-1)
    o = jnp.einsum("bhqk,bhkd->bhqd", p, vh).transpose(0, 2, 1, 3).reshape(B, S, D)
    y = x + (o @ wo + bo)
    mu = y.mean(-1, keepdims=True)
    var = ((y - mu) ** 2).mean(-1, keepdims=True)
    out = (y - mu) / jnp.sqrt(var + 1e-5) * gamma + beta
    return out, p.mean(axis=1)


if __name__ == "__main__":
    # Small shapes: batch=2, seq=8, d_model=32, num_heads=4 (head_dim=8).
    B, S, D, H = 2, 8, 32, 4
    key = jax.random.PRNGKey(0)
    kx, kp = jax.random.split(key)
    x = jax.random.normal(kx, (B, S, D), dtype=jnp.float32)
    params = init_params(kp, D)

    # TODO(synk): dropout inside nn.MultiheadAttention is only active in
    # training mode; this kernel implements the deterministic inference path.
    out, scores = global_self_attention(x, params, H)
    jax.block_until_ready((out, scores))

    assert out.shape == (B, S, D) and scores.shape == (B, S, S)
    assert bool(jnp.all(jnp.isfinite(out))) and bool(jnp.all(jnp.isfinite(scores)))

    # loose tolerance: bf16 MXU operands + approx reciprocal vs f32 reference
    ref_out, ref_scores = reference(x, params, H)
    assert float(jnp.max(jnp.abs(out - ref_out))) < 1e-1
    assert float(jnp.max(jnp.abs(scores - ref_scores))) < 5e-2

    print("KERNEL_OK")
</pallas_src>

<mosaic_0001>
module attributes {stable_mosaic.version = 11 : i64} {
  func.func @gsa_kernel(%arg0: i32, %arg1: i32, %arg2: memref<1x8x32xf32, #tpu.memory_space<vmem>>, %arg3: memref<1x8x32xf32, #tpu.memory_space<vmem>>, %arg4: memref<32x32xbf16, #tpu.memory_space<vmem>>, %arg5: memref<32x32xbf16, #tpu.memory_space<vmem>>, %arg6: memref<32x32xbf16, #tpu.memory_space<vmem>>, %arg7: memref<1x32xf32, #tpu.memory_space<vmem>>, %arg8: memref<1x32xf32, #tpu.memory_space<vmem>>, %arg9: memref<1x32xf32, #tpu.memory_space<vmem>>, %arg10: memref<32x32xbf16, #tpu.memory_space<vmem>>, %arg11: memref<1x32xf32, #tpu.memory_space<vmem>>, %arg12: memref<1x32xf32, #tpu.memory_space<vmem>>, %arg13: memref<1x32xf32, #tpu.memory_space<vmem>>, %arg14: memref<1x8x32xf32, #tpu.memory_space<vmem>>, %arg15: memref<1x8x8xf32, #tpu.memory_space<vmem>>, %arg16: memref<4x8x8xbf16, #tpu.memory_space<vmem>>, %arg17: memref<4x8x8xbf16, #tpu.memory_space<vmem>>) attributes {dimension_semantics = [#tpu.dimension_semantics<parallel>, #tpu.dimension_semantics<arbitrary>], iteration_bounds = array<i64: 2, 1>, scalar_prefetch = 0 : i64, scratch_operands = 2 : i64, tpu.core_type = #tpu.core_type<tc>, window_params = [{transform_indices = @transform_0, window_bounds = array<i64: 1, 8, 32>}, {transform_indices = @transform_1, window_bounds = array<i64: 1, 8, 32>}, {pipeline_mode = #tpu.pipeline_mode<synchronous>, transform_indices = @transform_2, window_bounds = array<i64: 32, 32>}, {pipeline_mode = #tpu.pipeline_mode<synchronous>, transform_indices = @transform_3, window_bounds = array<i64: 32, 32>}, {pipeline_mode = #tpu.pipeline_mode<synchronous>, transform_indices = @transform_4, window_bounds = array<i64: 32, 32>}, {pipeline_mode = #tpu.pipeline_mode<synchronous>, transform_indices = @transform_5, window_bounds = array<i64: 1, 32>}, {pipeline_mode = #tpu.pipeline_mode<synchronous>, transform_indices = @transform_6, window_bounds = array<i64: 1, 32>}, {pipeline_mode = #tpu.pipeline_mode<synchronous>, transform_indices = @transform_7, window_bounds = array<i64: 1, 32>}, {pipeline_mode = #tpu.pipeline_mode<synchronous>, transform_indices = @transform_8, window_bounds = array<i64: 32, 32>}, {pipeline_mode = #tpu.pipeline_mode<synchronous>, transform_indices = @transform_9, window_bounds = array<i64: 1, 32>}, {pipeline_mode = #tpu.pipeline_mode<synchronous>, transform_indices = @transform_10, window_bounds = array<i64: 1, 32>}, {pipeline_mode = #tpu.pipeline_mode<synchronous>, transform_indices = @transform_11, window_bounds = array<i64: 1, 32>}, {transform_indices = @transform_12, window_bounds = array<i64: 1, 8, 32>}, {transform_indices = @transform_13, window_bounds = array<i64: 1, 8, 8>}]} {
    %c0_i32 = arith.constant 0 : i32
    %0 = arith.cmpi eq, %arg1, %c0_i32 : i32
    %1 = arith.extui %0 : i1 to i32
    %c0_i32_0 = arith.constant 0 : i32
    %2 = arith.cmpi ne, %1, %c0_i32_0 : i32
    scf.if %2 {
      %c0_40 = arith.constant 0 : index
      %c0_41 = arith.constant 0 : index
      %c0_42 = arith.constant 0 : index
      %73 = vector.load %arg3[%c0_40, %c0_41, %c0_42] : memref<1x8x32xf32, #tpu.memory_space<vmem>>, vector<1x8x32xf32>
      %74 = vector.shape_cast %73 : vector<1x8x32xf32> to vector<8x32xf32>
      %75 = arith.truncf %74 : vector<8x32xf32> to vector<8x32xbf16>
      %c0_43 = arith.constant 0 : index
      %c0_44 = arith.constant 0 : index
      %76 = vector.load %arg5[%c0_43, %c0_44] : memref<32x32xbf16, #tpu.memory_space<vmem>>, vector<32x32xbf16>
      %cst_45 = arith.constant dense<0.000000e+00> : vector<8x32xf32>
      %77 = tpu.matmul %75, %76, %cst_45 {dimension_numbers = #tpu.dot_dimension_numbers<[1], [0], [0], [1], [0, 0, 1, 1], [], []>} : vector<8x32xbf16>, vector<32x32xbf16>, vector<8x32xf32> -> vector<8x32xf32>
      %c0_46 = arith.constant 0 : index
      %c0_47 = arith.constant 0 : index
      %78 = vector.load %arg8[%c0_46, %c0_47] : memref<1x32xf32, #tpu.memory_space<vmem>>, vector<1x32xf32>
      %79 = vector.broadcast %78 : vector<1x32xf32> to vector<8x32xf32>
      %80 = arith.addf %77, %79 : vector<8x32xf32>
      %c0_48 = arith.constant 0 : index
      %c0_49 = arith.constant 0 : index
      %81 = vector.load %arg6[%c0_48, %c0_49] : memref<32x32xbf16, #tpu.memory_space<vmem>>, vector<32x32xbf16>
      %cst_50 = arith.constant dense<0.000000e+00> : vector<8x32xf32>
      %82 = tpu.matmul %75, %81, %cst_50 {dimension_numbers = #tpu.dot_dimension_numbers<[1], [0], [0], [1], [0, 0, 1, 1], [], []>} : vector<8x32xbf16>, vector<32x32xbf16>, vector<8x32xf32> -> vector<8x32xf32>
      %c0_51 = arith.constant 0 : index
      %c0_52 = arith.constant 0 : index
      %83 = vector.load %arg9[%c0_51, %c0_52] : memref<1x32xf32, #tpu.memory_space<vmem>>, vector<1x32xf32>
      %84 = vector.broadcast %83 : vector<1x32xf32> to vector<8x32xf32>
      %85 = arith.addf %82, %84 : vector<8x32xf32>
      %86 = vector.shape_cast %80 : vector<8x32xf32> to vector<8x4x8xf32>
      %87 = tpu.transpose %86, [1, 0, 2] : vector<8x4x8xf32> -> vector<4x8x8xf32>
      %88 = arith.truncf %87 : vector<4x8x8xf32> to vector<4x8x8xbf16>
      %c0_53 = arith.constant 0 : index
      %c0_54 = arith.constant 0 : index
      %c0_55 = arith.constant 0 : index
      %89 = vector.load %arg16[%c0_53, %c0_54, %c0_55] : memref<4x8x8xbf16, #tpu.memory_space<vmem>>, vector<4x8x8xbf16>
      tpu.vector_store %arg16[%c0_53, %c0_54, %c0_55], %88 {strides = array<i32>} : memref<4x8x8xbf16, #tpu.memory_space<vmem>>, vector<4x8x8xbf16>,
      %90 = vector.shape_cast %85 : vector<8x32xf32> to vector<8x4x8xf32>
      %91 = tpu.transpose %90, [1, 0, 2] : vector<8x4x8xf32> -> vector<4x8x8xf32>
      %92 = arith.truncf %91 : vector<4x8x8xf32> to vector<4x8x8xbf16>
      %c0_56 = arith.constant 0 : index
      %c0_57 = arith.constant 0 : index
      %c0_58 = arith.constant 0 : index
      %93 = vector.load %arg17[%c0_56, %c0_57, %c0_58] : memref<4x8x8xbf16, #tpu.memory_space<vmem>>, vector<4x8x8xbf16>
      tpu.vector_store %arg17[%c0_56, %c0_57, %c0_58], %92 {strides = array<i32>} : memref<4x8x8xbf16, #tpu.memory_space<vmem>>, vector<4x8x8xbf16>,
    } else {
    }
    %c0 = arith.constant 0 : index
    %c0_1 = arith.constant 0 : index
    %c0_2 = arith.constant 0 : index
    %3 = vector.load %arg2[%c0, %c0_1, %c0_2] : memref<1x8x32xf32, #tpu.memory_space<vmem>>, vector<1x8x32xf32>
    %4 = vector.shape_cast %3 : vector<1x8x32xf32> to vector<8x32xf32>
    %5 = arith.truncf %4 : vector<8x32xf32> to vector<8x32xbf16>
    %c0_3 = arith.constant 0 : index
    %c0_4 = arith.constant 0 : index
    %6 = vector.load %arg4[%c0_3, %c0_4] : memref<32x32xbf16, #tpu.memory_space<vmem>>, vector<32x32xbf16>
    %cst = arith.constant dense<0.000000e+00> : vector<8x32xf32>
    %7 = tpu.matmul %5, %6, %cst {dimension_numbers = #tpu.dot_dimension_numbers<[1], [0], [0], [1], [0, 0, 1, 1], [], []>} : vector<8x32xbf16>, vector<32x32xbf16>, vector<8x32xf32> -> vector<8x32xf32>
    %c0_5 = arith.constant 0 : index
    %c0_6 = arith.constant 0 : index
    %8 = vector.load %arg7[%c0_5, %c0_6] : memref<1x32xf32, #tpu.memory_space<vmem>>, vector<1x32xf32>
    %9 = vector.broadcast %8 : vector<1x32xf32> to vector<8x32xf32>
    %10 = arith.addf %7, %9 : vector<8x32xf32>
    %cst_7 = arith.constant 0.353553385 : f32
    %11 = vector.broadcast %cst_7 : f32 to vector<8x32xf32>
    %12 = arith.mulf %10, %11 : vector<8x32xf32>
    %13 = vector.shape_cast %12 : vector<8x32xf32> to vector<8x4x8xf32>
    %14 = tpu.transpose %13, [1, 0, 2] : vector<8x4x8xf32> -> vector<4x8x8xf32>
    %15 = arith.truncf %14 : vector<4x8x8xf32> to vector<4x8x8xbf16>
    %c0_8 = arith.constant 0 : index
    %c0_9 = arith.constant 0 : index
    %c0_10 = arith.constant 0 : index
    %16 = vector.load %arg16[%c0_8, %c0_9, %c0_10] : memref<4x8x8xbf16, #tpu.memory_space<vmem>>, vector<4x8x8xbf16>
    "tpu.trace_start"() <{level = 10 : i32, message = "hqd,hkd->hqk"}> : () -> ()
    %cst_11 = arith.constant dense<0.000000e+00> : vector<4x8x8xf32>
    %17 = tpu.matmul %15, %16, %cst_11 {dimension_numbers = #tpu.dot_dimension_numbers<[2], [2], [1], [1], [0, 0, 0, 1, 1, 1], [0], [0]>} : vector<4x8x8xbf16>, vector<4x8x8xbf16>, vector<4x8x8xf32> -> vector<4x8x8xf32>
    "tpu.trace_stop"() : () -> ()
    %cst_12 = arith.constant dense<0xFF800000> : vector<4x8xf32>
    %18 = vector.multi_reduction <maximumf>, %17, %cst_12 [2] : vector<4x8x8xf32> to vector<4x8xf32>
    %19 = vector.shape_cast %18 : vector<4x8xf32> to vector<4x8x1xf32>
    %20 = vector.broadcast %19 : vector<4x8x1xf32> to vector<4x8x8xf32>
    %21 = arith.subf %17, %20 : vector<4x8x8xf32>
    %22 = math.exp %21 : vector<4x8x8xf32>
    %cst_13 = arith.constant dense<0.000000e+00> : vector<4x8xf32>
    %23 = vector.multi_reduction <add>, %22, %cst_13 [2] : vector<4x8x8xf32> to vector<4x8xf32>
    %24 = vector.shape_cast %23 : vector<4x8xf32> to vector<4x8x1xf32>
    %25 = tpu.reciprocal %24 {approx = true} : vector<4x8x1xf32> -> vector<4x8x1xf32>
    %26 = vector.broadcast %25 : vector<4x8x1xf32> to vector<4x8x8xf32>
    %27 = arith.mulf %22, %26 : vector<4x8x8xf32>
    %28 = arith.truncf %27 : vector<4x8x8xf32> to vector<4x8x8xbf16>
    %c0_14 = arith.constant 0 : index
    %c0_15 = arith.constant 0 : index
    %c0_16 = arith.constant 0 : index
    %29 = vector.load %arg17[%c0_14, %c0_15, %c0_16] : memref<4x8x8xbf16, #tpu.memory_space<vmem>>, vector<4x8x8xbf16>
    "tpu.trace_start"() <{level = 10 : i32, message = "hqk,hkd->hqd"}> : () -> ()
    %cst_17 = arith.constant dense<0.000000e+00> : vector<4x8x8xf32>
    %30 = tpu.matmul %28, %29, %cst_17 {dimension_numbers = #tpu.dot_dimension_numbers<[2], [1], [1], [2], [0, 0, 0, 1, 1, 2], [0], [0]>} : vector<4x8x8xbf16>, vector<4x8x8xbf16>, vector<4x8x8xf32> -> vector<4x8x8xf32>
    "tpu.trace_stop"() : () -> ()
    %31 = tpu.transpose %30, [1, 0, 2] : vector<4x8x8xf32> -> vector<8x4x8xf32>
    %32 = vector.shape_cast %31 : vector<8x4x8xf32> to vector<8x32xf32>
    %33 = arith.truncf %32 : vector<8x32xf32> to vector<8x32xbf16>
    %c0_18 = arith.constant 0 : index
    %c0_19 = arith.constant 0 : index
    %34 = vector.load %arg10[%c0_18, %c0_19] : memref<32x32xbf16, #tpu.memory_space<vmem>>, vector<32x32xbf16>
    %cst_20 = arith.constant dense<0.000000e+00> : vector<8x32xf32>
    %35 = tpu.matmul %33, %34, %cst_20 {dimension_numbers = #tpu.dot_dimension_numbers<[1], [0], [0], [1], [0, 0, 1, 1], [], []>} : vector<8x32xbf16>, vector<32x32xbf16>, vector<8x32xf32> -> vector<8x32xf32>
    %c0_21 = arith.constant 0 : index
    %c0_22 = arith.constant 0 : index
    %36 = vector.load %arg11[%c0_21, %c0_22] : memref<1x32xf32, #tpu.memory_space<vmem>>, vector<1x32xf32>
    %37 = vector.broadcast %36 : vector<1x32xf32> to vector<8x32xf32>
    %38 = arith.addf %35, %37 : vector<8x32xf32>
    %39 = arith.addf %4, %38 : vector<8x32xf32>
    %cst_23 = arith.constant dense<0.000000e+00> : vector<8xf32>
    %40 = vector.multi_reduction <add>, %39, %cst_23 [1] : vector<8x32xf32> to vector<8xf32>
    %41 = vector.shape_cast %40 : vector<8xf32> to vector<8x1xf32>
    %cst_24 = arith.constant 3.200000e+01 : f32
    %42 = vector.broadcast %cst_24 : f32 to vector<8x1xf32>
    %43 = arith.divf %41, %42 : vector<8x1xf32>
    %44 = vector.broadcast %43 : vector<8x1xf32> to vector<8x32xf32>
    %45 = arith.subf %39, %44 : vector<8x32xf32>
    %46 = arith.mulf %45, %45 : vector<8x32xf32>
    %cst_25 = arith.constant dense<0.000000e+00> : vector<8xf32>
    %47 = vector.multi_reduction <add>, %46, %cst_25 [1] : vector<8x32xf32> to vector<8xf32>
    %48 = vector.shape_cast %47 : vector<8xf32> to vector<8x1xf32>
    %cst_26 = arith.constant 3.200000e+01 : f32
    %49 = vector.broadcast %cst_26 : f32 to vector<8x1xf32>
    %50 = arith.divf %48, %49 : vector<8x1xf32>
    %51 = vector.broadcast %43 : vector<8x1xf32> to vector<8x32xf32>
    %52 = arith.subf %39, %51 : vector<8x32xf32>
    %cst_27 = arith.constant 9.99999974E-6 : f32
    %53 = vector.broadcast %cst_27 : f32 to vector<8x1xf32>
    %54 = arith.addf %50, %53 : vector<8x1xf32>
    %55 = math.rsqrt %54 : vector<8x1xf32>
    %56 = vector.broadcast %55 : vector<8x1xf32> to vector<8x32xf32>
    %57 = arith.mulf %52, %56 : vector<8x32xf32>
    %c0_28 = arith.constant 0 : index
    %c0_29 = arith.constant 0 : index
    %58 = vector.load %arg12[%c0_28, %c0_29] : memref<1x32xf32, #tpu.memory_space<vmem>>, vector<1x32xf32>
    %59 = vector.broadcast %58 : vector<1x32xf32> to vector<8x32xf32>
    %60 = arith.mulf %57, %59 : vector<8x32xf32>
    %c0_30 = arith.constant 0 : index
    %c0_31 = arith.constant 0 : index
    %61 = vector.load %arg13[%c0_30, %c0_31] : memref<1x32xf32, #tpu.memory_space<vmem>>, vector<1x32xf32>
    %62 = vector.broadcast %61 : vector<1x32xf32> to vector<8x32xf32>
    %63 = arith.addf %60, %62 : vector<8x32xf32>
    %c0_32 = arith.constant 0 : index
    %c0_33 = arith.constant 0 : index
    %c0_34 = arith.constant 0 : index
    %64 = vector.load %arg14[%c0_32, %c0_33, %c0_34] : memref<1x8x32xf32, #tpu.memory_space<vmem>>, vector<1x8x32xf32>
    %65 = vector.shape_cast %64 : vector<1x8x32xf32> to vector<8x32xf32>
    %66 = vector.shape_cast %63 : vector<8x32xf32> to vector<1x8x32xf32>
    tpu.vector_store %arg14[%c0_32, %c0_33, %c0_34], %66 {strides = array<i32>} : memref<1x8x32xf32, #tpu.memory_space<vmem>>, vector<1x8x32xf32>,
    %cst_35 = arith.constant dense<0.000000e+00> : vector<8x8xf32>
    %67 = vector.multi_reduction <add>, %27, %cst_35 [0] : vector<4x8x8xf32> to vector<8x8xf32>
    %cst_36 = arith.constant 4.000000e+00 : f32
    %68 = vector.broadcast %cst_36 : f32 to vector<8x8xf32>
    %69 = arith.divf %67, %68 : vector<8x8xf32>
    %c0_37 = arith.constant 0 : index
    %c0_38 = arith.constant 0 : index
    %c0_39 = arith.constant 0 : index
    %70 = vector.load %arg15[%c0_37, %c0_38, %c0_39] : memref<1x8x8xf32, #tpu.memory_space<vmem>>, vector<1x8x8xf32>
    %71 = vector.shape_cast %70 : vector<1x8x8xf32> to vector<8x8xf32>
    %72 = vector.shape_cast %69 : vector<8x8xf32> to vector<1x8x8xf32>
    tpu.vector_store %arg15[%c0_37, %c0_38, %c0_39], %72 {strides = array<i32>} : memref<1x8x8xf32, #tpu.memory_space<vmem>>, vector<1x8x8xf32>,
    return
  }
  func.func @transform_0(%arg0: i32, %arg1: i32) -> (i32, i32, i32) {
    %c0_i32 = arith.constant 0 : i32
    %c0_i32_0 = arith.constant 0 : i32
    return %arg0, %arg1, %c0_i32 : i32, i32, i32
  }
  func.func @transform_1(%arg0: i32, %arg1: i32) -> (i32, i32, i32) {
    %c0_i32 = arith.constant 0 : i32
    %c0_i32_0 = arith.constant 0 : i32
    %c0_i32_1 = arith.constant 0 : i32
    return %arg0, %c0_i32, %c0_i32_0 : i32, i32, i32
  }
  func.func @transform_2(%arg0: i32, %arg1: i32) -> (i32, i32) {
    %c0_i32 = arith.constant 0 : i32
    %c0_i32_0 = arith.constant 0 : i32
    %c0_i32_1 = arith.constant 0 : i32
    return %c0_i32, %c0_i32_0 : i32, i32
  }
  func.func @transform_3(%arg0: i32, %arg1: i32) -> (i32, i32) {
    %c0_i32 = arith.constant 0 : i32
    %c0_i32_0 = arith.constant 0 : i32
    %c0_i32_1 = arith.constant 0 : i32
    return %c0_i32, %c0_i32_0 : i32, i32
  }
  func.func @transform_4(%arg0: i32, %arg1: i32) -> (i32, i32) {
    %c0_i32 = arith.constant 0 : i32
    %c0_i32_0 = arith.constant 0 : i32
    %c0_i32_1 = arith.constant 0 : i32
    return %c0_i32, %c0_i32_0 : i32, i32
  }
  func.func @transform_5(%arg0: i32, %arg1: i32) -> (i32, i32) {
    %c0_i32 = arith.constant 0 : i32
    %c0_i32_0 = arith.constant 0 : i32
    %c0_i32_1 = arith.constant 0 : i32
    return %c0_i32, %c0_i32_0 : i32, i32
  }
  func.func @transform_6(%arg0: i32, %arg1: i32) -> (i32, i32) {
    %c0_i32 = arith.constant 0 : i32
    %c0_i32_0 = arith.constant 0 : i32
    %c0_i32_1 = arith.constant 0 : i32
    return %c0_i32, %c0_i32_0 : i32, i32
  }
  func.func @transform_7(%arg0: i32, %arg1: i32) -> (i32, i32) {
    %c0_i32 = arith.constant 0 : i32
    %c0_i32_0 = arith.constant 0 : i32
    %c0_i32_1 = arith.constant 0 : i32
    return %c0_i32, %c0_i32_0 : i32, i32
  }
  func.func @transform_8(%arg0: i32, %arg1: i32) -> (i32, i32) {
    %c0_i32 = arith.constant 0 : i32
    %c0_i32_0 = arith.constant 0 : i32
    %c0_i32_1 = arith.constant 0 : i32
    return %c0_i32, %c0_i32_0 : i32, i32
  }
  func.func @transform_9(%arg0: i32, %arg1: i32) -> (i32, i32) {
    %c0_i32 = arith.constant 0 : i32
    %c0_i32_0 = arith.constant 0 : i32
    %c0_i32_1 = arith.constant 0 : i32
    return %c0_i32, %c0_i32_0 : i32, i32
  }
  func.func @transform_10(%arg0: i32, %arg1: i32) -> (i32, i32) {
    %c0_i32 = arith.constant 0 : i32
    %c0_i32_0 = arith.constant 0 : i32
    %c0_i32_1 = arith.constant 0 : i32
    return %c0_i32, %c0_i32_0 : i32, i32
  }
  func.func @transform_11(%arg0: i32, %arg1: i32) -> (i32, i32) {
    %c0_i32 = arith.constant 0 : i32
    %c0_i32_0 = arith.constant 0 : i32
    %c0_i32_1 = arith.constant 0 : i32
    return %c0_i32, %c0_i32_0 : i32, i32
  }
  func.func @transform_12(%arg0: i32, %arg1: i32) -> (i32, i32, i32) {
    %c0_i32 = arith.constant 0 : i32
    %c0_i32_0 = arith.constant 0 : i32
    return %arg0, %arg1, %c0_i32 : i32, i32, i32
  }
  func.func @transform_13(%arg0: i32, %arg1: i32) -> (i32, i32, i32) {
    %c0_i32 = arith.constant 0 : i32
    %c0_i32_0 = arith.constant 0 : i32
    return %arg0, %arg1, %c0_i32 : i32, i32, i32
  }
}

</mosaic_0001>

<llo_original>
// kernel: tpu_custom_call.1
$region0: #{tpu_custom_call.1}
  #allocation0 [shape = 'u32[]', space=smem, size = 0x4, offset = 0x4, fixed_abs, tag = 'smem constant byte address 0x4 - core index']
  #allocation1 [shape = 'u32[144,128]{1,0:T(1,128)}', space=vmem, size = 0x12000, scoped, tag = 'internal scratch']
  #allocation2 [shape = 'bf16[4,8,8]{2,1,0:T(8,128)(2,1)}', space=vmem, size = 0x2000, scoped, tag = 'scratch operand']
  #allocation3 [shape = 'bf16[4,8,8]{2,1,0:T(8,128)(2,1)}', space=vmem, size = 0x2000, scoped, tag = 'scratch operand']
  %s0 = inlined_call_operand.hbm [shape: f32[2,8,32], index: 0, kind: input, shape index: {}]
  %s1 = inlined_call_operand.hbm [shape: f32[2,8,32], index: 1, kind: input, shape index: {}]
  %s2 = inlined_call_operand.hbm [shape: bf16[32,32], index: 2, kind: input, shape index: {}]
  %s3 = inlined_call_operand.hbm [shape: bf16[32,32], index: 3, kind: input, shape index: {}]
  %s4 = inlined_call_operand.hbm [shape: bf16[32,32], index: 4, kind: input, shape index: {}]
  %s5 = inlined_call_operand.hbm [shape: f32[1,32], index: 5, kind: input, shape index: {}]
  %s6 = inlined_call_operand.hbm [shape: f32[1,32], index: 6, kind: input, shape index: {}]
  %s7 = inlined_call_operand.hbm [shape: f32[1,32], index: 7, kind: input, shape index: {}]
  %s8 = inlined_call_operand.hbm [shape: bf16[32,32], index: 8, kind: input, shape index: {}]
  %s9 = inlined_call_operand.hbm [shape: f32[1,32], index: 9, kind: input, shape index: {}]
  %s10 = inlined_call_operand.hbm [shape: f32[1,32], index: 10, kind: input, shape index: {}]
  %s11 = inlined_call_operand.hbm [shape: f32[1,32], index: 11, kind: input, shape index: {}]
  %s12 = inlined_call_operand.hbm [shape: f32[2,8,32], index: 12, kind: output, shape index: {0}]
  %s13 = inlined_call_operand.hbm [shape: f32[2,8,8], index: 13, kind: output, shape index: {1}]
  %14 = xla_tuple %s12, %s13
  %s15 = sld [smem:[#allocation0]]
  $region141: #{tpu_custom_call.1} parent=0
    _
  %s17 = ssub.s32 1, %s15
  %s18 = scalar_select 0, %s17, %s15
  $region1: #{tpu_custom_call.1} parent=0
    #allocation4 [shape = 'u8[8192]{0}', space=vmem, size = 0x2000, scoped, tag = 'input window, operand 0']
    #allocation5 [shape = 's32[2]{0}', space=sflag, size = 0x8, scoped, tag = 'scoped memory for tpu_custom_call.1']
    #allocation6 [shape = 's32[2]{0}', space=sflag, size = 0x8, scoped, tag = 'scoped memory for tpu_custom_call.1']
    #allocation7 [shape = 'u8[8192]{0}', space=vmem, size = 0x2000, scoped, tag = 'input window, operand 1']
    #allocation8 [shape = 's32[2]{0}', space=sflag, size = 0x8, scoped, tag = 'scoped memory for tpu_custom_call.1']
    #allocation9 [shape = 'u8[8192]{0}', space=vmem, size = 0x2000, scoped, tag = 'input window, operand 2, single buffered']
    #allocation10 [shape = 'u8[8192]{0}', space=vmem, size = 0x2000, scoped, tag = 'input window, operand 3, single buffered']
    #allocation11 [shape = 's32[1]{0}', space=sflag, size = 0x4, scoped, tag = 'scoped memory for tpu_custom_call.1']
    #allocation12 [shape = 'u8[8192]{0}', space=vmem, size = 0x2000, scoped, tag = 'input window, operand 4, single buffered']
    #allocation13 [shape = 'u8[512]{0}', space=vmem, size = 0x400, scoped, tag = 'input window, operand 5, single buffered']
    #allocation14 [shape = 's32[1]{0}', space=sflag, size = 0x4, scoped, tag = 'scoped memory for tpu_custom_call.1']
    #allocation15 [shape = 'u8[512]{0}', space=vmem, size = 0x400, scoped, tag = 'input window, operand 6, single buffered']
    #allocation16 [shape = 'u8[512]{0}', space=vmem, size = 0x400, scoped, tag = 'input window, operand 7, single buffered']
    #allocation17 [shape = 's32[1]{0}', space=sflag, size = 0x4, scoped, tag = 'scoped memory for tpu_custom_call.1']
    #allocation18 [shape = 'u8[8192]{0}', space=vmem, size = 0x2000, scoped, tag = 'input window, operand 8, single buffered']
    #allocation19 [shape = 'u8[512]{0}', space=vmem, size = 0x400, scoped, tag = 'input window, operand 9, single buffered']
    #allocation20 [shape = 's32[1]{0}', space=sflag, size = 0x4, scoped, tag = 'scoped memory for tpu_custom_call.1']
    #allocation21 [shape = 'u8[512]{0}', space=vmem, size = 0x400, scoped, tag = 'input window, operand 10, single buffered']
    #allocation22 [shape = 'u8[512]{0}', space=vmem, size = 0x400, scoped, tag = 'input window, operand 11, single buffered']
    #allocation23 [shape = 's32[1]{0}', space=sflag, size = 0x4, scoped, tag = 'scoped memory for tpu_custom_call.1']
    #allocation24 [shape = 'u8[8192]{0}', space=vmem, size = 0x2000, scoped, tag = 'output window, operand 0']
    #allocation25 [shape = 'u8[8192]{0}', space=vmem, size = 0x2000, scoped, tag = 'output window, operand 1']
    #allocation26 [shape = 's32[2]{0}', space=sflag, size = 0x8, scoped, tag = 'scoped memory for tpu_custom_call.1']
    %19 = vsyncpa [#allocation5], 0
    %s20 = scalar_lea.sflag [#allocation5], 1
    %21 = vsyncpa %s20, 0
    %22 = vsyncpa [#allocation8], 0
    %s23 = scalar_lea.sflag [#allocation8], 1
    %24 = vsyncpa %s23, 0
    %25 = vsyncpa [#allocation11], 0
    %26 = vsyncpa [#allocation14], 0
    %27 = vsyncpa [#allocation17], 0
    %28 = vsyncpa [#allocation20], 0
    %29 = vsyncpa [#allocation23], 0
    %30 = vsyncpa [#allocation6], 0
    %s31 = scalar_lea.sflag [#allocation6], 1
    %32 = vsyncpa %s31, 0
    %33 = vsyncpa [#allocation26], 0
    %s34 = scalar_lea.sflag [#allocation26], 1
    %35 = vsyncpa %s34, 0
    loop: start=0, step=1, limit=4
    $region2: #{tpu_custom_call.1} parent=1 // loop_pre_header
      _
    $region3: #{tpu_custom_call.1} parent=1 // loop_header
      %s37 = sphi 0, %s41
      %p38 = scmp.ge.s32.totalorder %s37, 4
      %s44 = sphi 0, %s56
      %s45 = sphi 0, %s52
      %s46 = sphi 0, %s44
      %s47 = sphi 0, %s45
      %s48 = sphi 0, %s46
      %s49 = sphi 0, %s47
      %s61 = sphi 0, %s63
      %s64 = sphi 0, %s61
      %s65 = sphi 0, %s64
      %s81 = sphi 0, %s65
      %s87 = sphi 0, %s89
      %s90 = sphi 0, %s87
      %s91 = sphi 0, %s90
      %s107 = sphi 0, %s91
      %s111 = sphi 0, %s111
      %s113 = sphi 0, %s111
      %s114 = sphi 0, %s113
      %s128 = sphi 0, %s114
      %s132 = sphi 0, %s132
      %s134 = sphi 0, %s132
      %s135 = sphi 0, %s134
      %s149 = sphi 0, %s135
      %s153 = sphi 0, %s153
      %s155 = sphi 0, %s153
      %s156 = sphi 0, %s155
      %s170 = sphi 0, %s156
      %s174 = sphi 0, %s174
      %s176 = sphi 0, %s174
      %s177 = sphi 0, %s176
      %s191 = sphi 0, %s177
      %s195 = sphi 0, %s195
      %s197 = sphi 0, %s195
      %s198 = sphi 0, %s197
      %s212 = sphi 0, %s198
      %s216 = sphi 0, %s216
      %s218 = sphi 0, %s216
      %s219 = sphi 0, %s218
      %s233 = sphi 0, %s219
      %s237 = sphi 0, %s237
      %s239 = sphi 0, %s237
      %s240 = sphi 0, %s239
      %s254 = sphi 0, %s240
      %s258 = sphi 0, %s258
      %s260 = sphi 0, %s258
      %s261 = sphi 0, %s260
      %s275 = sphi 0, %s261
      %s279 = sphi 0, %s279
      %s281 = sphi 0, %s279
      %s282 = sphi 0, %s281
      %s296 = sphi 0, %s282
      %s300 = sphi 0, %s300
      %s302 = sphi 0, %s300
      %s303 = sphi 0, %s302
      %s317 = sphi 0, %s303
      %s325 = sphi 0, %s327
      %s328 = sphi 0, %s325
      %s329 = sphi 0, %s328
      %s345 = sphi 0, %s329
      %s353 = sphi 0, %s355
      %s356 = sphi 0, %s353
      %s357 = sphi 0, %s356
      %s373 = sphi 0, %s357
    $region4: #{tpu_custom_call.1} parent=1 // loop_header_branch
      %40 = sbr.rel (%p38) target = $region8
    $region5: #{tpu_custom_call.1} parent=1 // loop_body
      %s42 = ssub.s32 %s37, 1
      %s43 = ssub.s32 %s37, 2
      %s50 = sadd.s32 1, %s45
      %p51 = scmp.ge.s32.totalorder %s50, 1
      %s52 = scalar_select %p51, 0, %s50
      %s53 = sadd.s32 1, %s44
      %s54 = scalar_select %p51, %s53, %s44
      %p55 = scmp.ge.s32.totalorder %s54, 2
      %s56 = scalar_select %p55, 0, %s54
      %s57 = ssub.s32 %s44, %s56
      %s58 = ssub.s32 %s45, %s52
      %s59 = sor.u32 %s57, %s58
      %p60 = scmp.eq.s32.totalorder %s59, 0
      %s62 = sadd.s32 %s61, 1
      %s63 = scalar_select %p60, %s61, %s62
      %p66 = pneg %p60
      %p67 = scmp.eq.s32.totalorder %s37, 1
      %p68 = por %p66, %p67
      %p69 = scmp.ne.s32.totalorder %s61, %s64
      %p70 = scmp.eq.s32.totalorder %s37, 0
      %p71 = por %p69, %p70
      %p72 = scmp.ne.s32.totalorder %s61, %s64
      %p73 = scmp.eq.s32.totalorder %s42, 1
      %p74 = por %p72, %p73
      %p75 = scmp.ne.s32.totalorder %s64, %s65
      %p76 = scmp.eq.s32.totalorder %s42, 0
      %p77 = por %p75, %p76
      %p78 = scmp.ne.s32.totalorder %s64, %s65
      %p79 = scmp.eq.s32.totalorder %s43, 1
      %p80 = por %p78, %p79
      %p82 = scmp.ne.s32.totalorder %s65, %s81
      %p83 = scmp.eq.s32.totalorder %s43, 0
      %p84 = por %p82, %p83
      %s85 = ssub.s32 %s44, %s56
      %p86 = scmp.eq.s32.totalorder %s85, 0
      %s88 = sadd.s32 %s87, 1
      %s89 = scalar_select %p86, %s87, %s88
      %p92 = pneg %p86
      %p93 = scmp.eq.s32.totalorder %s37, 1
      %p94 = por %p92, %p93
      %p95 = scmp.ne.s32.totalorder %s87, %s90
      %p96 = scmp.eq.s32.totalorder %s37, 0
      %p97 = por %p95, %p96
      %p98 = scmp.ne.s32.totalorder %s87, %s90
      %p99 = scmp.eq.s32.totalorder %s42, 1
      %p100 = por %p98, %p99
      %p101 = scmp.ne.s32.totalorder %s90, %s91
      %p102 = scmp.eq.s32.totalorder %s42, 0
      %p103 = por %p101, %p102
      %p104 = scmp.ne.s32.totalorder %s90, %s91
      %p105 = scmp.eq.s32.totalorder %s43, 1
      %p106 = por %p104, %p105
      %p108 = scmp.ne.s32.totalorder %s91, %s107
      %p109 = scmp.eq.s32.totalorder %s43, 0
      %p110 = por %p108, %p109
      %s112 = sadd.s32 %s111, 1
      %p115 = scmp.eq.s32.totalorder %s37, 1
      %p116 = scmp.ne.s32.totalorder %s111, %s113
      %p117 = scmp.eq.s32.totalorder %s37, 0
      %p118 = por %p116, %p117
      %p119 = scmp.ne.s32.totalorder %s111, %s113
      %p120 = scmp.eq.s32.totalorder %s42, 1
      %p121 = por %p119, %p120
      %p122 = scmp.ne.s32.totalorder %s113, %s114
      %p123 = scmp.eq.s32.totalorder %s42, 0
      %p124 = por %p122, %p123
      %p125 = scmp.ne.s32.totalorder %s113, %s114
      %p126 = scmp.eq.s32.totalorder %s43, 1
      %p127 = por %p125, %p126
      %p129 = scmp.ne.s32.totalorder %s114, %s128
      %p130 = scmp.eq.s32.totalorder %s43, 0
      %p131 = por %p129, %p130
      %s133 = sadd.s32 %s132, 1
      %p136 = scmp.eq.s32.totalorder %s37, 1
      %p137 = scmp.ne.s32.totalorder %s132, %s134
      %p138 = scmp.eq.s32.totalorder %s37, 0
      %p139 = por %p137, %p138
      %p140 = scmp.ne.s32.totalorder %s132, %s134
      %p141 = scmp.eq.s32.totalorder %s42, 1
      %p142 = por %p140, %p141
      %p143 = scmp.ne.s32.totalorder %s134, %s135
      %p144 = scmp.eq.s32.totalorder %s42, 0
      %p145 = por %p143, %p144
      %p146 = scmp.ne.s32.totalorder %s134, %s135
      %p147 = scmp.eq.s32.totalorder %s43, 1
      %p148 = por %p146, %p147
      %p150 = scmp.ne.s32.totalorder %s135, %s149
      %p151 = scmp.eq.s32.totalorder %s43, 0
      %p152 = por %p150, %p151
      %s154 = sadd.s32 %s153, 1
      %p157 = scmp.eq.s32.totalorder %s37, 1
      %p158 = scmp.ne.s32.totalorder %s153, %s155
      %p159 = scmp.eq.s32.totalorder %s37, 0
      %p160 = por %p158, %p159
      %p161 = scmp.ne.s32.totalorder %s153, %s155
      %p162 = scmp.eq.s32.totalorder %s42, 1
      %p163 = por %p161, %p162
      %p164 = scmp.ne.s32.totalorder %s155, %s156
      %p165 = scmp.eq.s32.totalorder %s42, 0
      %p166 = por %p164, %p165
      %p167 = scmp.ne.s32.totalorder %s155, %s156
      %p168 = scmp.eq.s32.totalorder %s43, 1
      %p169 = por %p167, %p168
      %p171 = scmp.ne.s32.totalorder %s156, %s170
      %p172 = scmp.eq.s32.totalorder %s43, 0
      %p173 = por %p171, %p172
      %s175 = sadd.s32 %s174, 1
      %p178 = scmp.eq.s32.totalorder %s37, 1
      %p179 = scmp.ne.s32.totalorder %s174, %s176
      %p180 = scmp.eq.s32.totalorder %s37, 0
      %p181 = por %p179, %p180
      %p182 = scmp.ne.s32.totalorder %s174, %s176
      %p183 = scmp.eq.s32.totalorder %s42, 1
      %p184 = por %p182, %p183
      %p185 = scmp.ne.s32.totalorder %s176, %s177
      %p186 = scmp.eq.s32.totalorder %s42, 0
      %p187 = por %p185, %p186
      %p188 = scmp.ne.s32.totalorder %s176, %s177
      %p189 = scmp.eq.s32.totalorder %s43, 1
      %p190 = por %p188, %p189
      %p192 = scmp.ne.s32.totalorder %s177, %s191
      %p193 = scmp.eq.s32.totalorder %s43, 0
      %p194 = por %p192, %p193
      %s196 = sadd.s32 %s195, 1
      %p199 = scmp.eq.s32.totalorder %s37, 1
      %p200 = scmp.ne.s32.totalorder %s195, %s197
      %p201 = scmp.eq.s32.totalorder %s37, 0
      %p202 = por %p200, %p201
      %p203 = scmp.ne.s32.totalorder %s195, %s197
      %p204 = scmp.eq.s32.totalorder %s42, 1
      %p205 = por %p203, %p204
      %p206 = scmp.ne.s32.totalorder %s197, %s198
      %p207 = scmp.eq.s32.totalorder %s42, 0
      %p208 = por %p206, %p207
      %p209 = scmp.ne.s32.totalorder %s197, %s198
      %p210 = scmp.eq.s32.totalorder %s43, 1
      %p211 = por %p209, %p210
      %p213 = scmp.ne.s32.totalorder %s198, %s212
      %p214 = scmp.eq.s32.totalorder %s43, 0
      %p215 = por %p213, %p214
      %s217 = sadd.s32 %s216, 1
      %p220 = scmp.eq.s32.totalorder %s37, 1
      %p221 = scmp.ne.s32.totalorder %s216, %s218
      %p222 = scmp.eq.s32.totalorder %s37, 0
      %p223 = por %p221, %p222
      %p224 = scmp.ne.s32.totalorder %s216, %s218
      %p225 = scmp.eq.s32.totalorder %s42, 1
      %p226 = por %p224, %p225
      %p227 = scmp.ne.s32.totalorder %s218, %s219
      %p228 = scmp.eq.s32.totalorder %s42, 0
      %p229 = por %p227, %p228
      %p230 = scmp.ne.s32.totalorder %s218, %s219
      %p231 = scmp.eq.s32.totalorder %s43, 1
      %p232 = por %p230, %p231
      %p234 = scmp.ne.s32.totalorder %s219, %s233
      %p235 = scmp.eq.s32.totalorder %s43, 0
      %p236 = por %p234, %p235
      %s238 = sadd.s32 %s237, 1
      %p241 = scmp.eq.s32.totalorder %s37, 1
      %p242 = scmp.ne.s32.totalorder %s237, %s239
      %p243 = scmp.eq.s32.totalorder %s37, 0
      %p244 = por %p242, %p243
      %p245 = scmp.ne.s32.totalorder %s237, %s239
      %p246 = scmp.eq.s32.totalorder %s42, 1
      %p247 = por %p245, %p246
      %p248 = scmp.ne.s32.totalorder %s239, %s240
      %p249 = scmp.eq.s32.totalorder %s42, 0
      %p250 = por %p248, %p249
      %p251 = scmp.ne.s32.totalorder %s239, %s240
      %p252 = scmp.eq.s32.totalorder %s43, 1
      %p253 = por %p251, %p252
      %p255 = scmp.ne.s32.totalorder %s240, %s254
      %p256 = scmp.eq.s32.totalorder %s43, 0
      %p257 = por %p255, %p256
      %s259 = sadd.s32 %s258, 1
      %p262 = scmp.eq.s32.totalorder %s37, 1
      %p263 = scmp.ne.s32.totalorder %s258, %s260
      %p264 = scmp.eq.s32.totalorder %s37, 0
      %p265 = por %p263, %p264
      %p266 = scmp.ne.s32.totalorder %s258, %s260
      %p267 = scmp.eq.s32.totalorder %s42, 1
      %p268 = por %p266, %p267
      %p269 = scmp.ne.s32.totalorder %s260, %s261
      %p270 = scmp.eq.s32.totalorder %s42, 0
      %p271 = por %p269, %p270
      %p272 = scmp.ne.s32.totalorder %s260, %s261
      %p273 = scmp.eq.s32.totalorder %s43, 1
      %p274 = por %p272, %p273
      %p276 = scmp.ne.s32.totalorder %s261, %s275
      %p277 = scmp.eq.s32.totalorder %s43, 0
      %p278 = por %p276, %p277
      %s280 = sadd.s32 %s279, 1
      %p283 = scmp.eq.s32.totalorder %s37, 1
      %p284 = scmp.ne.s32.totalorder %s279, %s281
      %p285 = scmp.eq.s32.totalorder %s37, 0
      %p286 = por %p284, %p285
      %p287 = scmp.ne.s32.totalorder %s279, %s281
      %p288 = scmp.eq.s32.totalorder %s42, 1
      %p289 = por %p287, %p288
      %p290 = scmp.ne.s32.totalorder %s281, %s282
      %p291 = scmp.eq.s32.totalorder %s42, 0
      %p292 = por %p290, %p291
      %p293 = scmp.ne.s32.totalorder %s281, %s282
      %p294 = scmp.eq.s32.totalorder %s43, 1
      %p295 = por %p293, %p294
      %p297 = scmp.ne.s32.totalorder %s282, %s296
      %p298 = scmp.eq.s32.totalorder %s43, 0
      %p299 = por %p297, %p298
      %s301 = sadd.s32 %s300, 1
      %p304 = scmp.eq.s32.totalorder %s37, 1
      %p305 = scmp.ne.s32.totalorder %s300, %s302
      %p306 = scmp.eq.s32.totalorder %s37, 0
      %p307 = por %p305, %p306
      %p308 = scmp.ne.s32.totalorder %s300, %s302
      %p309 = scmp.eq.s32.totalorder %s42, 1
      %p310 = por %p308, %p309
      %p311 = scmp.ne.s32.totalorder %s302, %s303
      %p312 = scmp.eq.s32.totalorder %s42, 0
      %p313 = por %p311, %p312
      %p314 = scmp.ne.s32.totalorder %s302, %s303
      %p315 = scmp.eq.s32.totalorder %s43, 1
      %p316 = por %p314, %p315
      %p318 = scmp.ne.s32.totalorder %s303, %s317
      %p319 = scmp.eq.s32.totalorder %s43, 0
      %p320 = por %p318, %p319
      %s321 = ssub.s32 %s44, %s56
      %s322 = ssub.s32 %s45, %s52
      %s323 = sor.u32 %s321, %s322
      %p324 = scmp.eq.s32.totalorder %s323, 0
      %s326 = sadd.s32 %s325, 1
      %s327 = scalar_select %p324, %s325, %s326
      %p330 = pneg %p324
      %p331 = scmp.eq.s32.totalorder %s37, 1
      %p332 = por %p330, %p331
      %p333 = scmp.ne.s32.totalorder %s325, %s328
      %p334 = scmp.eq.s32.totalorder %s37, 0
      %p335 = por %p333, %p334
      %p336 = scmp.ne.s32.totalorder %s325, %s328
      %p337 = scmp.eq.s32.totalorder %s42, 1
      %p338 = por %p336, %p337
      %p339 = scmp.ne.s32.totalorder %s328, %s329
      %p340 = scmp.eq.s32.totalorder %s42, 0
      %p341 = por %p339, %p340
      %p342 = scmp.ne.s32.totalorder %s328, %s329
      %p343 = scmp.eq.s32.totalorder %s43, 1
      %p344 = por %p342, %p343
      %p346 = scmp.ne.s32.totalorder %s329, %s345
      %p347 = scmp.eq.s32.totalorder %s43, 0
      %p348 = por %p346, %p347
      %s349 = ssub.s32 %s44, %s56
      %s350 = ssub.s32 %s45, %s52
      %s351 = sor.u32 %s349, %s350
      %p352 = scmp.eq.s32.totalorder %s351, 0
      %s354 = sadd.s32 %s353, 1
      %s355 = scalar_select %p352, %s353, %s354
      %p358 = pneg %p352
      %p359 = scmp.eq.s32.totalorder %s37, 1
      %p360 = por %p358, %p359
      %p361 = scmp.ne.s32.totalorder %s353, %s356
      %p362 = scmp.eq.s32.totalorder %s37, 0
      %p363 = por %p361, %p362
      %p364 = scmp.ne.s32.totalorder %s353, %s356
      %p365 = scmp.eq.s32.totalorder %s42, 1
      %p366 = por %p364, %p365
      %p367 = scmp.ne.s32.totalorder %s356, %s357
      %p368 = scmp.eq.s32.totalorder %s42, 0
      %p369 = por %p367, %p368
      %p370 = scmp.ne.s32.totalorder %s356, %s357
      %p371 = scmp.eq.s32.totalorder %s43, 1
      %p372 = por %p370, %p371
      %p374 = scmp.ne.s32.totalorder %s357, %s373
      %p375 = scmp.eq.s32.totalorder %s43, 0
      %p376 = por %p374, %p375
      %p377 = scmp.le.s32.totalorder 1, %s37
      %p378 = scmp.lt.s32.totalorder %s37, 3
      %p379 = pnand %p377, %p378
      %p380 = pneg %p379
      // Predicated region
      $region9: #{tpu_custom_call.1} parent=5 // pred_check
        _
      $region10: #{tpu_custom_call.1} parent=5 // pred_check_branch
        %382 = sbr.rel (%p379) target = $region12
      $region11: #{tpu_custom_call.1} parent=5 // pred_region
        %s383 = ssub.s32 %s37, 1
        // Predicated region
        $region13: #{tpu_custom_call.1} parent=11 // pred_check
          %p384 = pneg %p124
        $region14: #{tpu_custom_call.1} parent=11 // pred_check_branch
          %386 = sbr.rel (%p384) target = $region16
        $region15: #{tpu_custom_call.1} parent=11 // pred_region
          %s388 = ssub.s32 256, 256
          %389 = vsyncadd [#allocation8], %s388
          %s390 = sshll.u32 [#allocation9], 4
          %s391 = int_to_ptr.vmem [resolvable:$true] %s390
          %396 = dma.hbm_to_vmem [thread:$0]  %s2, 256, %s391, [#allocation8], 64, 64, 4
        $region16: #{tpu_custom_call.1} parent=11 // pred_fallthru
          _
        // Predicated region
        $region17: #{tpu_custom_call.1} parent=11 // pred_check
          %p397 = pneg %p145
        $region18: #{tpu_custom_call.1} parent=11 // pred_check_branch
          %399 = sbr.rel (%p397) target = $region20
        $region19: #{tpu_custom_call.1} parent=11 // pred_region
          %s401 = ssub.s32 256, 256
          %402 = vsyncadd [#allocation11], %s401
          %s403 = sshll.u32 [#allocation10], 4
          %s404 = int_to_ptr.vmem [resolvable:$true] %s403
          %409 = dma.hbm_to_vmem [thread:$0]  %s3, 256, %s404, [#allocation11], 64, 64, 4
        $region20: #{tpu_custom_call.1} parent=11 // pred_fallthru
          _
        // Predicated region
        $region21: #{tpu_custom_call.1} parent=11 // pred_check
          %p410 = pneg %p166
        $region22: #{tpu_custom_call.1} parent=11 // pred_check_branch
          %412 = sbr.rel (%p410) target = $region24
        $region23: #{tpu_custom_call.1} parent=11 // pred_region
          %s414 = ssub.s32 256, 256
          %415 = vsyncadd [#allocation11], %s414
          %s416 = sshll.u32 [#allocation12], 4
          %s417 = int_to_ptr.vmem [resolvable:$true] %s416
          %422 = dma.hbm_to_vmem [thread:$0]  %s4, 256, %s417, [#allocation11], 64, 64, 4
        $region24: #{tpu_custom_call.1} parent=11 // pred_fallthru
          _
        // Predicated region
        $region25: #{tpu_custom_call.1} parent=11 // pred_check
          %p423 = pneg %p187
        $region26: #{tpu_custom_call.1} parent=11 // pred_check_branch
          %425 = sbr.rel (%p423) target = $region28
        $region27: #{tpu_custom_call.1} parent=11 // pred_region
          %s427 = ssub.s32 16, 16
          %428 = vsyncadd [#allocation14], %s427
          %s430 = sshll.u32 [#allocation13], 4
          %s431 = int_to_ptr.vmem [resolvable:$true] %s430
          %433 = dma.hbm_to_vmem [thread:$0]  %s5, 16, %s431, [#allocation14]
        $region28: #{tpu_custom_call.1} parent=11 // pred_fallthru
          _
        // Predicated region
        $region29: #{tpu_custom_call.1} parent=11 // pred_check
          %p434 = pneg %p208
        $region30: #{tpu_custom_call.1} parent=11 // pred_check_branch
          %436 = sbr.rel (%p434) target = $region32
        $region31: #{tpu_custom_call.1} parent=11 // pred_region
          %s438 = ssub.s32 16, 16
          %439 = vsyncadd [#allocation14], %s438
          %s441 = sshll.u32 [#allocation15], 4
          %s442 = int_to_ptr.vmem [resolvable:$true] %s441
          %444 = dma.hbm_to_vmem [thread:$0]  %s6, 16, %s442, [#allocation14]
        $region32: #{tpu_custom_call.1} parent=11 // pred_fallthru
          _
        // Predicated region
        $region33: #{tpu_custom_call.1} parent=11 // pred_check
          %p445 = pneg %p229
        $region34: #{tpu_custom_call.1} parent=11 // pred_check_branch
          %447 = sbr.rel (%p445) target = $region36
        $region35: #{tpu_custom_call.1} parent=11 // pred_region
          %s449 = ssub.s32 16, 16
          %450 = vsyncadd [#allocation17], %s449
          %s452 = sshll.u32 [#allocation16], 4
          %s453 = int_to_ptr.vmem [resolvable:$true] %s452
          %455 = dma.hbm_to_vmem [thread:$0]  %s7, 16, %s453, [#allocation17]
        $region36: #{tpu_custom_call.1} parent=11 // pred_fallthru
          _
        // Predicated region
        $region37: #{tpu_custom_call.1} parent=11 // pred_check
          %p456 = pneg %p250
        $region38: #{tpu_custom_call.1} parent=11 // pred_check_branch
          %458 = sbr.rel (%p456) target = $region40
        $region39: #{tpu_custom_call.1} parent=11 // pred_region
          %s460 = ssub.s32 256, 256
          %461 = vsyncadd [#allocation17], %s460
          %s462 = sshll.u32 [#allocation18], 4
          %s463 = int_to_ptr.vmem [resolvable:$true] %s462
          %468 = dma.hbm_to_vmem [thread:$0]  %s8, 256, %s463, [#allocation17], 64, 64, 4
        $region40: #{tpu_custom_call.1} parent=11 // pred_fallthru
          _
        // Predicated region
        $region41: #{tpu_custom_call.1} parent=11 // pred_check
          %p469 = pneg %p271
        $region42: #{tpu_custom_call.1} parent=11 // pred_check_branch
          %471 = sbr.rel (%p469) target = $region44
        $region43: #{tpu_custom_call.1} parent=11 // pred_region
          %s473 = ssub.s32 16, 16
          %474 = vsyncadd [#allocation20], %s473
          %s476 = sshll.u32 [#allocation19], 4
          %s477 = int_to_ptr.vmem [resolvable:$true] %s476
          %479 = dma.hbm_to_vmem [thread:$0]  %s9, 16, %s477, [#allocation20]
        $region44: #{tpu_custom_call.1} parent=11 // pred_fallthru
          _
        // Predicated region
        $region45: #{tpu_custom_call.1} parent=11 // pred_check
          %p480 = pneg %p292
        $region46: #{tpu_custom_call.1} parent=11 // pred_check_branch
          %482 = sbr.rel (%p480) target = $region48
        $region47: #{tpu_custom_call.1} parent=11 // pred_region
          %s484 = ssub.s32 16, 16
          %485 = vsyncadd [#allocation20], %s484
          %s487 = sshll.u32 [#allocation21], 4
          %s488 = int_to_ptr.vmem [resolvable:$true] %s487
          %490 = dma.hbm_to_vmem [thread:$0]  %s10, 16, %s488, [#allocation20]
        $region48: #{tpu_custom_call.1} parent=11 // pred_fallthru
          _
        // Predicated region
        $region49: #{tpu_custom_call.1} parent=11 // pred_check
          %p491 = pneg %p313
        $region50: #{tpu_custom_call.1} parent=11 // pred_check_branch
          %493 = sbr.rel (%p491) target = $region52
        $region51: #{tpu_custom_call.1} parent=11 // pred_region
          %s495 = ssub.s32 16, 16
          %496 = vsyncadd [#allocation23], %s495
          %s498 = sshll.u32 [#allocation22], 4
          %s499 = int_to_ptr.vmem [resolvable:$true] %s498
          %501 = dma.hbm_to_vmem [thread:$0]  %s11, 16, %s499, [#allocation23]
        $region52: #{tpu_custom_call.1} parent=11 // pred_fallthru
          _
      $region12: #{tpu_custom_call.1} parent=5 // pred_fallthru
        _
      %p502 = scmp.lt.s32.totalorder %s37, 2
      // Predicated region
      $region53: #{tpu_custom_call.1} parent=5 // pred_check
        %p503 = pneg %p502
      $region54: #{tpu_custom_call.1} parent=5 // pred_check_branch
        %505 = sbr.rel (%p503) target = $region56
      $region55: #{tpu_custom_call.1} parent=5 // pred_region
        // Predicated region
        $region57: #{tpu_custom_call.1} parent=55 // pred_check
          %p506 = pneg %p71
        $region58: #{tpu_custom_call.1} parent=55 // pred_check_branch
          %508 = sbr.rel (%p506) target = $region60
        $region59: #{tpu_custom_call.1} parent=55 // pred_region
          %s509 = sand.u32 %s61, 1
          %s510 = scalar_lea.sflag [#allocation5], %s509
          %s511 = sand.u32 %s61, 1
          %s512 = smul.addr %s511, 8
          %s513 = scalar_lea.vmem [#allocation4], %s512
          %s515 = ssub.s32 128, 128
          %516 = vsyncadd %s510, %s515
          %s517 = sadd.s32 %s45, %s44
          %s518 = smul.addr %s517, 128
          %s519 = scalar_lea.hbm %s0, %s518
          %s521 = sshll.u32 %s513, 4
          %s522 = int_to_ptr.vmem [resolvable:$true] %s521
          %524 = dma.hbm_to_vmem [thread:$0]  %s519, 128, %s522, %s510
        $region60: #{tpu_custom_call.1} parent=55 // pred_fallthru
          _
        // Predicated region
        $region61: #{tpu_custom_call.1} parent=55 // pred_check
          %p525 = pneg %p97
        $region62: #{tpu_custom_call.1} parent=55 // pred_check_branch
          %527 = sbr.rel (%p525) target = $region64
        $region63: #{tpu_custom_call.1} parent=55 // pred_region
          %s528 = sand.u32 %s37, 1
          %s529 = scalar_lea.sflag [#allocation8], %s528
          %s530 = sand.u32 %s87, 1
          %s531 = smul.addr %s530, 8
          %s532 = scalar_lea.vmem [#allocation7], %s531
          %s534 = ssub.s32 128, 128
          %535 = vsyncadd %s529, %s534
          %s536 = smul.addr %s44, 128
          %s537 = scalar_lea.hbm %s1, %s536
          %s539 = sshll.u32 %s532, 4
          %s540 = int_to_ptr.vmem [resolvable:$true] %s539
          %542 = dma.hbm_to_vmem [thread:$0]  %s537, 128, %s540, %s529
        $region64: #{tpu_custom_call.1} parent=55 // pred_fallthru
          _
      $region56: #{tpu_custom_call.1} parent=5 // pred_fallthru
        _
      %p543 = scmp.le.s32.totalorder 1, %s37
      %p544 = scmp.lt.s32.totalorder %s37, 3
      %p545 = pnand %p543, %p544
      %p546 = pneg %p545
      // Predicated region
      $region65: #{tpu_custom_call.1} parent=5 // pred_check
        _
      $region66: #{tpu_custom_call.1} parent=5 // pred_check_branch
        %548 = sbr.rel (%p545) target = $region68
      $region67: #{tpu_custom_call.1} parent=5 // pred_region
        %s549 = ssub.s32 %s37, 1
        %s550 = sand.u32 %s64, 1
        %s551 = scalar_lea.sflag [#allocation5], %s550
        %s552 = sand.u32 %s64, 1
        %s553 = smul.addr %s552, 8
        %s554 = scalar_lea.vmem [#allocation4], %s553
        // Predicated region
        $region69: #{tpu_custom_call.1} parent=67 // pred_check
          %p555 = pneg %p77
        $region70: #{tpu_custom_call.1} parent=67 // pred_check_branch
          %557 = sbr.rel (%p555) target = $region72
        $region71: #{tpu_custom_call.1} parent=67 // pred_region
          %558 = dma.done %s551, 128
        $region72: #{tpu_custom_call.1} parent=67 // pred_fallthru
          _
        %s559 = sand.u32 %s42, 1
        %s560 = scalar_lea.sflag [#allocation8], %s559
        %s561 = sand.u32 %s90, 1
        %s562 = smul.addr %s561, 8
        %s563 = scalar_lea.vmem [#allocation7], %s562
        // Predicated region
        $region73: #{tpu_custom_call.1} parent=67 // pred_check
          %p564 = pneg %p103
        $region74: #{tpu_custom_call.1} parent=67 // pred_check_branch
          %566 = sbr.rel (%p564) target = $region76
        $region75: #{tpu_custom_call.1} parent=67 // pred_region
          %567 = dma.done %s560, 128
        $region76: #{tpu_custom_call.1} parent=67 // pred_fallthru
          _
        // Predicated region
        $region77: #{tpu_custom_call.1} parent=67 // pred_check
          %p568 = pneg %p124
        $region78: #{tpu_custom_call.1} parent=67 // pred_check_branch
          %570 = sbr.rel (%p568) target = $region80
        $region79: #{tpu_custom_call.1} parent=67 // pred_region
          %571 = dma.done [#allocation8], 256
        $region80: #{tpu_custom_call.1} parent=67 // pred_fallthru
          _
        // Predicated region
        $region81: #{tpu_custom_call.1} parent=67 // pred_check
          %p572 = pneg %p145
        $region82: #{tpu_custom_call.1} parent=67 // pred_check_branch
          %574 = sbr.rel (%p572) target = $region84
        $region83: #{tpu_custom_call.1} parent=67 // pred_region
          %575 = dma.done [#allocation11], 256
        $region84: #{tpu_custom_call.1} parent=67 // pred_fallthru
          _
        // Predicated region
        $region85: #{tpu_custom_call.1} parent=67 // pred_check
          %p576 = pneg %p166
        $region86: #{tpu_custom_call.1} parent=67 // pred_check_branch
          %578 = sbr.rel (%p576) target = $region88
        $region87: #{tpu_custom_call.1} parent=67 // pred_region
          %579 = dma.done [#allocation11], 256
        $region88: #{tpu_custom_call.1} parent=67 // pred_fallthru
          _
        // Predicated region
        $region89: #{tpu_custom_call.1} parent=67 // pred_check
          %p580 = pneg %p187
        $region90: #{tpu_custom_call.1} parent=67 // pred_check_branch
          %582 = sbr.rel (%p580) target = $region92
        $region91: #{tpu_custom_call.1} parent=67 // pred_region
          %583 = dma.done [#allocation14], 16
        $region92: #{tpu_custom_call.1} parent=67 // pred_fallthru
          _
        // Predicated region
        $region93: #{tpu_custom_call.1} parent=67 // pred_check
          %p584 = pneg %p208
        $region94: #{tpu_custom_call.1} parent=67 // pred_check_branch
          %586 = sbr.rel (%p584) target = $region96
        $region95: #{tpu_custom_call.1} parent=67 // pred_region
          %587 = dma.done [#allocation14], 16
        $region96: #{tpu_custom_call.1} parent=67 // pred_fallthru
          _
        // Predicated region
        $region97: #{tpu_custom_call.1} parent=67 // pred_check
          %p588 = pneg %p229
        $region98: #{tpu_custom_call.1} parent=67 // pred_check_branch
          %590 = sbr.rel (%p588) target = $region100
        $region99: #{tpu_custom_call.1} parent=67 // pred_region
          %591 = dma.done [#allocation17], 16
        $region100: #{tpu_custom_call.1} parent=67 // pred_fallthru
          _
        // Predicated region
        $region101: #{tpu_custom_call.1} parent=67 // pred_check
          %p592 = pneg %p250
        $region102: #{tpu_custom_call.1} parent=67 // pred_check_branch
          %594 = sbr.rel (%p592) target = $region104
        $region103: #{tpu_custom_call.1} parent=67 // pred_region
          %595 = dma.done [#allocation17], 256
        $region104: #{tpu_custom_call.1} parent=67 // pred_fallthru
          _
        // Predicated region
        $region105: #{tpu_custom_call.1} parent=67 // pred_check
          %p596 = pneg %p271
        $region106: #{tpu_custom_call.1} parent=67 // pred_check_branch
          %598 = sbr.rel (%p596) target = $region108
        $region107: #{tpu_custom_call.1} parent=67 // pred_region
          %599 = dma.done [#allocation20], 16
        $region108: #{tpu_custom_call.1} parent=67 // pred_fallthru
          _
        // Predicated region
        $region109: #{tpu_custom_call.1} parent=67 // pred_check
          %p600 = pneg %p292
        $region110: #{tpu_custom_call.1} parent=67 // pred_check_branch
          %602 = sbr.rel (%p600) target = $region112
        $region111: #{tpu_custom_call.1} parent=67 // pred_region
          %603 = dma.done [#allocation20], 16
        $region112: #{tpu_custom_call.1} parent=67 // pred_fallthru
          _
        // Predicated region
        $region113: #{tpu_custom_call.1} parent=67 // pred_check
          %p604 = pneg %p313
        $region114: #{tpu_custom_call.1} parent=67 // pred_check_branch
          %606 = sbr.rel (%p604) target = $region116
        $region115: #{tpu_custom_call.1} parent=67 // pred_region
          %607 = dma.done [#allocation23], 16
        $region116: #{tpu_custom_call.1} parent=67 // pred_fallthru
          _
        %s608 = sand.u32 %s64, 1
        %s609 = scalar_lea.sflag [#allocation5], %s608
        %s610 = sand.u32 %s64, 1
        %s611 = smul.addr %s610, 8
        %s612 = scalar_lea.vmem [#allocation4], %s611
        %p613 = pneg %p77
        %p614 = pneg %p74
        %s615 = sand.u32 %s42, 1
        %s616 = scalar_lea.sflag [#allocation8], %s615
        %s617 = sand.u32 %s90, 1
        %s618 = smul.addr %s617, 8
        %s619 = scalar_lea.vmem [#allocation7], %s618
        %p620 = pneg %p103
        %p621 = pneg %p100
        %p622 = pneg %p124
        %p623 = pneg %p121
        %p624 = pneg %p145
        %p625 = pneg %p142
        %p626 = pneg %p166
        %p627 = pneg %p163
        %p628 = pneg %p187
        %p629 = pneg %p184
        %p630 = pneg %p208
        %p631 = pneg %p205
        %p632 = pneg %p229
        %p633 = pneg %p226
        %p634 = pneg %p250
        %p635 = pneg %p247
        %p636 = pneg %p271
        %p637 = pneg %p268
        %p638 = pneg %p292
        %p639 = pneg %p289
        %p640 = pneg %p313
        %p641 = pneg %p310
        %p642 = pneg %p341
        %p643 = pneg %p338
        %s644 = sand.u32 %s328, 1
        %s645 = scalar_lea.sflag [#allocation6], %s644
        %s646 = sand.u32 %s328, 1
        %s647 = smul.addr %s646, 8
        %s648 = scalar_lea.vmem [#allocation24], %s647
        %p649 = pneg %p369
        %p650 = pneg %p366
        %s651 = sand.u32 %s356, 1
        %s652 = scalar_lea.sflag [#allocation26], %s651
        %s653 = sand.u32 %s356, 1
        %s654 = smul.addr %s653, 8
        %s655 = scalar_lea.vmem [#allocation25], %s654
        %p657 = scmp.eq.s32.totalorder %s47, 0
        // Predicated region
        $region117: #{tpu_custom_call.1} parent=67 // pred_check
          %p658 = pneg %p657
        $region118: #{tpu_custom_call.1} parent=67 // pred_check_branch
          %660 = sbr.rel (%p658) target = $region120
        $region119: #{tpu_custom_call.1} parent=67 // pred_region
          %v661 = vld [vmem:[%s563] sm:$0xff]
          %v662 = vpack.c.bf16 %v661, %v661
          %v663 = vld [vmem:[#allocation10] sm:$0xf]
          %v664 = vld [vmem:[#allocation10 + $0x4] sm:$0xf]
          %v665 = vld [vmem:[#allocation10 + $0x8] sm:$0xf]
          %v666 = vld [vmem:[#allocation10 + $0xc] sm:$0xf]
          %v667 = vld [vmem:[#allocation15] sm:$0x1]
          %v669 = vlaneseq
          %v670 = vshrl.u32 %v669, 7
          %v671 = vsub.s32 0, %v670
          %v672 = vrot.slane %v667, %v671
          %v678 = vunpack.c.l.b16 %v663
          %v679 = vunpack.c.l.b16 %v664
          %v680 = vunpack.c.l.b16 %v665
          %v681 = vunpack.c.l.b16 %v666
          %v682 = vpack.c.b16 %v679, %v678
          %v683 = vpack.c.b16 %v681, %v680
          %vm686 = vcmask 261120
          %v688 = vsel %vm686, %v662, 0
          %690 = vmatprep.subr.bf16.mxu0 0
          %691 = vmatpush1.bf16.msra.mxu0 %v682
          %692 = vmatprep.subr.bf16.mxu0 0
          %693 = vmatpush1.bf16.msra.mxu0 %v683
          %694 = vmatprep.subr.bf16.mxu0 0
          %695 = vmatpush1.bf16.msra.mxu0 0
          %696 = vmatprep.subr.bf16.mxu0 0
          %697 = vmatpush1.bf16.msra.mxu0 0
          %698 = vmatprep.subr.bf16.mxu0 0
          %699 = vmatpush1.bf16.msra.mxu0 0
          %700 = vmatprep.subr.bf16.mxu0 0
          %701 = vmatpush1.bf16.msra.mxu0 0
          %702 = vmatprep.subr.bf16.mxu0 0
          %703 = vmatpush1.bf16.msra.mxu0 0
          %704 = vmatprep.subr.bf16.mxu0 0
          %705 = vmatpush1.bf16.msra.mxu0 0
          %706 = vmatprep.subr.bf16.mxu0 0
          %707 = vmatpush1.bf16.msra.mxu0 0
          %708 = vmatprep.subr.bf16.mxu0 0
          %709 = vmatpush1.bf16.msra.mxu0 0
          %710 = vmatprep.subr.bf16.mxu0 0
          %711 = vmatpush1.bf16.msra.mxu0 0
          %712 = vmatprep.subr.bf16.mxu0 0
          %713 = vmatpush1.bf16.msra.mxu0 0
          %714 = vmatprep.subr.bf16.mxu0 0
          %715 = vmatpush1.bf16.msra.mxu0 0
          %716 = vmatprep.subr.bf16.mxu0 0
          %717 = vmatpush1.bf16.msra.mxu0 0
          %718 = vmatprep.subr.bf16.mxu0 0
          %719 = vmatpush1.bf16.msra.mxu0 0
          %720 = vmatprep.subr.bf16.mxu0 0
          %721 = vmatpush1.bf16.msra.mxu0 0
          %722 = vmatprep.mubr.bf16.mxu0 0
          %723 = vmatmul.mubr.bf16.gmra.mrb[0].mxu0 %v688
          %v724 = vpop.f32.mrb[0].mxu0
          %v725 = vadd.f32 %v672, %v724
          %v726 = vpop.f32.mrb[0].mxu0
          %v727 = vpop.f32.mrb[0].mxu0
          %v728 = vpop.f32.mrb[0].mxu0
          %729 = vdwg.mxu0
          %v730 = vld [vmem:[#allocation12] sm:$0xf]
          %v731 = vld [vmem:[#allocation12 + $0x4] sm:$0xf]
          %v732 = vld [vmem:[#allocation12 + $0x8] sm:$0xf]
          %v733 = vld [vmem:[#allocation12 + $0xc] sm:$0xf]
          %v734 = vld [vmem:[#allocation16] sm:$0x1]
          %v736 = vlaneseq
          %v737 = vshrl.u32 %v736, 7
          %v738 = vsub.s32 0, %v737
          %v739 = vrot.slane %v734, %v738
          %v745 = vunpack.c.l.b16 %v730
          %v746 = vunpack.c.l.b16 %v731
          %v747 = vunpack.c.l.b16 %v732
          %v748 = vunpack.c.l.b16 %v733
          %v749 = vpack.c.b16 %v746, %v745
          %v750 = vpack.c.b16 %v748, %v747
          %753 = vmatprep.subr.bf16.mxu0 0
          %754 = vmatpush1.bf16.msra.mxu0 %v749
          %755 = vmatprep.subr.bf16.mxu0 0
          %756 = vmatpush1.bf16.msra.mxu0 %v750
          %757 = vmatprep.subr.bf16.mxu0 0
          %758 = vmatpush1.bf16.msra.mxu0 0
          %759 = vmatprep.subr.bf16.mxu0 0
          %760 = vmatpush1.bf16.msra.mxu0 0
          %761 = vmatprep.subr.bf16.mxu0 0
          %762 = vmatpush1.bf16.msra.mxu0 0
          %763 = vmatprep.subr.bf16.mxu0 0
          %764 = vmatpush1.bf16.msra.mxu0 0
          %765 = vmatprep.subr.bf16.mxu0 0
          %766 = vmatpush1.bf16.msra.mxu0 0
          %767 = vmatprep.subr.bf16.mxu0 0
          %768 = vmatpush1.bf16.msra.mxu0 0
          %769 = vmatprep.subr.bf16.mxu0 0
          %770 = vmatpush1.bf16.msra.mxu0 0
          %771 = vmatprep.subr.bf16.mxu0 0
          %772 = vmatpush1.bf16.msra.mxu0 0
          %773 = vmatprep.subr.bf16.mxu0 0
          %774 = vmatpush1.bf16.msra.mxu0 0
          %775 = vmatprep.subr.bf16.mxu0 0
          %776 = vmatpush1.bf16.msra.mxu0 0
          %777 = vmatprep.subr.bf16.mxu0 0
          %778 = vmatpush1.bf16.msra.mxu0 0
          %779 = vmatprep.subr.bf16.mxu0 0
          %780 = vmatpush1.bf16.msra.mxu0 0
          %781 = vmatprep.subr.bf16.mxu0 0
          %782 = vmatpush1.bf16.msra.mxu0 0
          %783 = vmatprep.subr.bf16.mxu0 0
          %784 = vmatpush1.bf16.msra.mxu0 0
          %785 = vmatprep.mubr.bf16.mxu0 0
          %786 = vmatmul.mubr.bf16.gmra.mrb[0].mxu0 %v688
          %v787 = vpop.f32.mrb[0].mxu0
          %v788 = vadd.f32 %v739, %v787
          %v789 = vpop.f32.mrb[0].mxu0
          %v790 = vpop.f32.mrb[0].mxu0
          %v791 = vpop.f32.mrb[0].mxu0
          %792 = vdwg.mxu0
          %794 = vrot.lane.b32.xlu0 %v725, 120
          %v795 = vpop.permute.xlu0 %794
          %797 = vrot.lane.b32.xlu0 %v725, 112
          %v798 = vpop.permute.xlu0 %797
          %800 = vrot.lane.b32.xlu0 %v725, 104
          %v801 = vpop.permute.xlu0 %800
          %v803 = vcombine.low %v725, %v798
          %v804 = vcombine.high %v725, %v798
          %v806 = vunpack.c.l.s4 1983009808
          %v807 = vunpack.c.0.s8 %v806
          %v808 = vlaneseq
          %v809 = vshrl.u32 %v808, 7
          %v810 = vsub.s32 %v807, %v809
          %v811 = vrot.slane %v803, %v810
          %v813 = vunpack.c.l.s4 1983009808
          %v814 = vunpack.c.0.s8 %v813
          %v815 = vlaneseq
          %v816 = vshrl.u32 %v815, 7
          %v817 = vsub.s32 %v814, %v816
          %v818 = vrot.slane %v804, %v817
          %v819 = vcombine.low %v795, %v801
          %v820 = vcombine.high %v795, %v801
          %v822 = vunpack.c.l.s4 1983009808
          %v823 = vunpack.c.0.s8 %v822
          %v824 = vlaneseq
          %v825 = vshrl.u32 %v824, 7
          %v826 = vsub.s32 %v823, %v825
          %v827 = vrot.slane %v819, %v826
          %v829 = vunpack.c.l.s4 1983009808
          %v830 = vunpack.c.0.s8 %v829
          %v831 = vlaneseq
          %v832 = vshrl.u32 %v831, 7
          %v833 = vsub.s32 %v830, %v832
          %v834 = vrot.slane %v820, %v833
          %v835 = vcombine.low %v811, %v827
          %v836 = vcombine.high %v811, %v827
          %v838 = vunpack.c.l.s4 1934713408
          %v839 = vunpack.c.0.s8 %v838
          %v840 = vlaneseq
          %v841 = vshrl.u32 %v840, 7
          %v842 = vsub.s32 %v839, %v841
          %v843 = vrot.slane %v835, %v842
          %v845 = vunpack.c.l.s4 1934713408
          %v846 = vunpack.c.0.s8 %v845
          %v847 = vlaneseq
          %v848 = vshrl.u32 %v847, 7
          %v849 = vsub.s32 %v846, %v848
          %v850 = vrot.slane %v836, %v849
          %v851 = vcombine.low %v818, %v834
          %v852 = vcombine.high %v818, %v834
          %v854 = vunpack.c.l.s4 1934713408
          %v855 = vunpack.c.0.s8 %v854
          %v856 = vlaneseq
          %v857 = vshrl.u32 %v856, 7
          %v858 = vsub.s32 %v855, %v857
          %v859 = vrot.slane %v851, %v858
          %v861 = vunpack.c.l.s4 1934713408
          %v862 = vunpack.c.0.s8 %v861
          %v863 = vlaneseq
          %v864 = vshrl.u32 %v863, 7
          %v865 = vsub.s32 %v862, %v864
          %v866 = vrot.slane %v852, %v865
          %v867 = vcombine.high %v843, 0.0
          %v868 = vcombine.high %v850, 0.0
          %v869 = vcombine.high %v859, 0.0
          %v870 = vcombine.high %v866, 0.0
          %v871 = vcombine.low %v843, %v850
          %v873 = vunpack.c.l.s4 1983009808
          %v874 = vunpack.c.0.s8 %v873
          %v875 = vlaneseq
          %v876 = vshrl.u32 %v875, 7
          %v877 = vsub.s32 %v874, %v876
          %v878 = vrot.slane %v871, %v877
          %v879 = vcombine.low %v867, %v868
          %v881 = vunpack.c.l.s4 1983009808
          %v882 = vunpack.c.0.s8 %v881
          %v883 = vlaneseq
          %v884 = vshrl.u32 %v883, 7
          %v885 = vsub.s32 %v882, %v884
          %v886 = vrot.slane %v879, %v885
          %v887 = vcombine.low %v859, %v866
          %v889 = vunpack.c.l.s4 1983009808
          %v890 = vunpack.c.0.s8 %v889
          %v891 = vlaneseq
          %v892 = vshrl.u32 %v891, 7
          %v893 = vsub.s32 %v890, %v892
          %v894 = vrot.slane %v887, %v893
          %v895 = vcombine.low %v869, %v870
          %v897 = vunpack.c.l.s4 1983009808
          %v898 = vunpack.c.0.s8 %v897
          %v899 = vlaneseq
          %v900 = vshrl.u32 %v899, 7
          %v901 = vsub.s32 %v898, %v900
          %v902 = vrot.slane %v895, %v901
          %v903 = vcombine.low %v878, %v886
          %v904 = vcombine.high %v878, %v886
          %v906 = vunpack.c.l.s4 1934713408
          %v907 = vunpack.c.0.s8 %v906
          %v908 = vlaneseq
          %v909 = vshrl.u32 %v908, 7
          %v910 = vsub.s32 %v907, %v909
          %v911 = vrot.slane %v903, %v910
          %v913 = vunpack.c.l.s4 1934713408
          %v914 = vunpack.c.0.s8 %v913
          %v915 = vlaneseq
          %v916 = vshrl.u32 %v915, 7
          %v917 = vsub.s32 %v914, %v916
          %v918 = vrot.slane %v904, %v917
          %v919 = vcombine.low %v894, %v902
          %v920 = vcombine.high %v894, %v902
          %v922 = vunpack.c.l.s4 1934713408
          %v923 = vunpack.c.0.s8 %v922
          %v924 = vlaneseq
          %v925 = vshrl.u32 %v924, 7
          %v926 = vsub.s32 %v923, %v925
          %v927 = vrot.slane %v919, %v926
          %v929 = vunpack.c.l.s4 1934713408
          %v930 = vunpack.c.0.s8 %v929
          %v931 = vlaneseq
          %v932 = vshrl.u32 %v931, 7
          %v933 = vsub.s32 %v930, %v932
          %v934 = vrot.slane %v920, %v933
          %v935 = vcombine.low %v911, %v927
          %v936 = vcombine.high %v911, %v927
          %v937 = vcombine.low %v918, %v934
          %v938 = vcombine.high %v918, %v934
          %v939 = vpack.c.bf16 %v935, %v935
          %v940 = vpack.c.bf16 %v936, %v936
          %v941 = vpack.c.bf16 %v937, %v937
          %v942 = vpack.c.bf16 %v938, %v938
          %vm943 = vcmask 60416
          %944 = vst.msk [vmem:[#allocation2] sm:$0xf] %vm943, %v939
          %945 = vst.msk [vmem:[#allocation2 + $0x4] sm:$0xf] %vm943, %v940
          %946 = vst.msk [vmem:[#allocation2 + $0x8] sm:$0xf] %vm943, %v941
          %947 = vst.msk [vmem:[#allocation2 + $0xc] sm:$0xf] %vm943, %v942
          %949 = vrot.lane.b32.xlu0 %v788, 120
          %v950 = vpop.permute.xlu0 %949
          %952 = vrot.lane.b32.xlu0 %v788, 112
          %v953 = vpop.permute.xlu0 %952
          %955 = vrot.lane.b32.xlu0 %v788, 104
          %v956 = vpop.permute.xlu0 %955
          %v958 = vcombine.low %v788, %v953
          %v959 = vcombine.high %v788, %v953
          %v961 = vunpack.c.l.s4 1983009808
          %v962 = vunpack.c.0.s8 %v961
          %v963 = vlaneseq
          %v964 = vshrl.u32 %v963, 7
          %v965 = vsub.s32 %v962, %v964
          %v966 = vrot.slane %v958, %v965
          %v968 = vunpack.c.l.s4 1983009808
          %v969 = vunpack.c.0.s8 %v968
          %v970 = vlaneseq
          %v971 = vshrl.u32 %v970, 7
          %v972 = vsub.s32 %v969, %v971
          %v973 = vrot.slane %v959, %v972
          %v974 = vcombine.low %v950, %v956
          %v975 = vcombine.high %v950, %v956
          %v977 = vunpack.c.l.s4 1983009808
          %v978 = vunpack.c.0.s8 %v977
          %v979 = vlaneseq
          %v980 = vshrl.u32 %v979, 7
          %v981 = vsub.s32 %v978, %v980
          %v982 = vrot.slane %v974, %v981
          %v984 = vunpack.c.l.s4 1983009808
          %v985 = vunpack.c.0.s8 %v984
          %v986 = vlaneseq
          %v987 = vshrl.u32 %v986, 7
          %v988 = vsub.s32 %v985, %v987
          %v989 = vrot.slane %v975, %v988
          %v990 = vcombine.low %v966, %v982
          %v991 = vcombine.high %v966, %v982
          %v993 = vunpack.c.l.s4 1934713408
          %v994 = vunpack.c.0.s8 %v993
          %v995 = vlaneseq
          %v996 = vshrl.u32 %v995, 7
          %v997 = vsub.s32 %v994, %v996
          %v998 = vrot.slane %v990, %v997
          %v1000 = vunpack.c.l.s4 1934713408
          %v1001 = vunpack.c.0.s8 %v1000
          %v1002 = vlaneseq
          %v1003 = vshrl.u32 %v1002, 7
          %v1004 = vsub.s32 %v1001, %v1003
          %v1005 = vrot.slane %v991, %v1004
          %v1006 = vcombine.low %v973, %v989
          %v1007 = vcombine.high %v973, %v989
          %v1009 = vunpack.c.l.s4 1934713408
          %v1010 = vunpack.c.0.s8 %v1009
          %v1011 = vlaneseq
          %v1012 = vshrl.u32 %v1011, 7
          %v1013 = vsub.s32 %v1010, %v1012
          %v1014 = vrot.slane %v1006, %v1013
          %v1016 = vunpack.c.l.s4 1934713408
          %v1017 = vunpack.c.0.s8 %v1016
          %v1018 = vlaneseq
          %v1019 = vshrl.u32 %v1018, 7
          %v1020 = vsub.s32 %v1017, %v1019
          %v1021 = vrot.slane %v1007, %v1020
          %v1022 = vcombine.high %v998, 0.0
          %v1023 = vcombine.high %v1005, 0.0
          %v1024 = vcombine.high %v1014, 0.0
          %v1025 = vcombine.high %v1021, 0.0
          %v1026 = vcombine.low %v998, %v1005
          %v1028 = vunpack.c.l.s4 1983009808
          %v1029 = vunpack.c.0.s8 %v1028
          %v1030 = vlaneseq
          %v1031 = vshrl.u32 %v1030, 7
          %v1032 = vsub.s32 %v1029, %v1031
          %v1033 = vrot.slane %v1026, %v1032
          %v1034 = vcombine.low %v1022, %v1023
          %v1036 = vunpack.c.l.s4 1983009808
          %v1037 = vunpack.c.0.s8 %v1036
          %v1038 = vlaneseq
          %v1039 = vshrl.u32 %v1038, 7
          %v1040 = vsub.s32 %v1037, %v1039
          %v1041 = vrot.slane %v1034, %v1040
          %v1042 = vcombine.low %v1014, %v1021
          %v1044 = vunpack.c.l.s4 1983009808
          %v1045 = vunpack.c.0.s8 %v1044
          %v1046 = vlaneseq
          %v1047 = vshrl.u32 %v1046, 7
          %v1048 = vsub.s32 %v1045, %v1047
          %v1049 = vrot.slane %v1042, %v1048
          %v1050 = vcombine.low %v1024, %v1025
          %v1052 = vunpack.c.l.s4 1983009808
          %v1053 = vunpack.c.0.s8 %v1052
          %v1054 = vlaneseq
          %v1055 = vshrl.u32 %v1054, 7
          %v1056 = vsub.s32 %v1053, %v1055
          %v1057 = vrot.slane %v1050, %v1056
          %v1058 = vcombine.low %v1033, %v1041
          %v1059 = vcombine.high %v1033, %v1041
          %v1061 = vunpack.c.l.s4 1934713408
          %v1062 = vunpack.c.0.s8 %v1061
          %v1063 = vlaneseq
          %v1064 = vshrl.u32 %v1063, 7
          %v1065 = vsub.s32 %v1062, %v1064
          %v1066 = vrot.slane %v1058, %v1065
          %v1068 = vunpack.c.l.s4 1934713408
          %v1069 = vunpack.c.0.s8 %v1068
          %v1070 = vlaneseq
          %v1071 = vshrl.u32 %v1070, 7
          %v1072 = vsub.s32 %v1069, %v1071
          %v1073 = vrot.slane %v1059, %v1072
          %v1074 = vcombine.low %v1049, %v1057
          %v1075 = vcombine.high %v1049, %v1057
          %v1077 = vunpack.c.l.s4 1934713408
          %v1078 = vunpack.c.0.s8 %v1077
          %v1079 = vlaneseq
          %v1080 = vshrl.u32 %v1079, 7
          %v1081 = vsub.s32 %v1078, %v1080
          %v1082 = vrot.slane %v1074, %v1081
          %v1084 = vunpack.c.l.s4 1934713408
          %v1085 = vunpack.c.0.s8 %v1084
          %v1086 = vlaneseq
          %v1087 = vshrl.u32 %v1086, 7
          %v1088 = vsub.s32 %v1085, %v1087
          %v1089 = vrot.slane %v1075, %v1088
          %v1090 = vcombine.low %v1066, %v1082
          %v1091 = vcombine.high %v1066, %v1082
          %v1092 = vcombine.low %v1073, %v1089
          %v1093 = vcombine.high %v1073, %v1089
          %v1094 = vpack.c.bf16 %v1090, %v1090
          %v1095 = vpack.c.bf16 %v1091, %v1091
          %v1096 = vpack.c.bf16 %v1092, %v1092
          %v1097 = vpack.c.bf16 %v1093, %v1093
          %1098 = vst.msk [vmem:[#allocation3] sm:$0xf] %vm943, %v1094
          %1099 = vst.msk [vmem:[#allocation3 + $0x4] sm:$0xf] %vm943, %v1095
          %1100 = vst.msk [vmem:[#allocation3 + $0x8] sm:$0xf] %vm943, %v1096
          %1101 = vst.msk [vmem:[#allocation3 + $0xc] sm:$0xf] %vm943, %v1097
        $region120: #{tpu_custom_call.1} parent=67 // pred_fallthru
          _
        %v1102 = vld [vmem:[%s554] sm:$0xff]
        %v1103 = vpack.c.bf16 %v1102, %v1102
        %v1104 = vld [vmem:[#allocation9] sm:$0xf]
        %v1105 = vld [vmem:[#allocation9 + $0x4] sm:$0xf]
        %v1106 = vld [vmem:[#allocation9 + $0x8] sm:$0xf]
        %v1107 = vld [vmem:[#allocation9 + $0xc] sm:$0xf]
        %v1108 = vld [vmem:[#allocation13] sm:$0x1]
        %v1110 = vlaneseq
        %v1111 = vshrl.u32 %v1110, 7
        %v1112 = vsub.s32 0, %v1111
        %v1113 = vrot.slane %v1108, %v1112
        %v1119 = vunpack.c.l.b16 %v1104
        %v1120 = vunpack.c.l.b16 %v1105
        %v1121 = vunpack.c.l.b16 %v1106
        %v1122 = vunpack.c.l.b16 %v1107
        %v1123 = vpack.c.b16 %v1120, %v1119
        %v1124 = vpack.c.b16 %v1122, %v1121
        %vm1127 = vcmask 261120
        %v1129 = vsel %vm1127, %v1103, 0
        %1131 = vmatprep.subr.bf16.mxu0 0
        %1132 = vmatpush1.bf16.msra.mxu0 %v1123
        %1133 = vmatprep.subr.bf16.mxu0 0
        %1134 = vmatpush1.bf16.msra.mxu0 %v1124
        %1135 = vmatprep.subr.bf16.mxu0 0
        %1136 = vmatpush1.bf16.msra.mxu0 0
        %1137 = vmatprep.subr.bf16.mxu0 0
        %1138 = vmatpush1.bf16.msra.mxu0 0
        %1139 = vmatprep.subr.bf16.mxu0 0
        %1140 = vmatpush1.bf16.msra.mxu0 0
        %1141 = vmatprep.subr.bf16.mxu0 0
        %1142 = vmatpush1.bf16.msra.mxu0 0
        %1143 = vmatprep.subr.bf16.mxu0 0
        %1144 = vmatpush1.bf16.msra.mxu0 0
        %1145 = vmatprep.subr.bf16.mxu0 0
        %1146 = vmatpush1.bf16.msra.mxu0 0
        %1147 = vmatprep.subr.bf16.mxu0 0
        %1148 = vmatpush1.bf16.msra.mxu0 0
        %1149 = vmatprep.subr.bf16.mxu0 0
        %1150 = vmatpush1.bf16.msra.mxu0 0
        %1151 = vmatprep.subr.bf16.mxu0 0
        %1152 = vmatpush1.bf16.msra.mxu0 0
        %1153 = vmatprep.subr.bf16.mxu0 0
        %1154 = vmatpush1.bf16.msra.mxu0 0
        %1155 = vmatprep.subr.bf16.mxu0 0
        %1156 = vmatpush1.bf16.msra.mxu0 0
        %1157 = vmatprep.subr.bf16.mxu0 0
        %1158 = vmatpush1.bf16.msra.mxu0 0
        %1159 = vmatprep.subr.bf16.mxu0 0
        %1160 = vmatpush1.bf16.msra.mxu0 0
        %1161 = vmatprep.subr.bf16.mxu0 0
        %1162 = vmatpush1.bf16.msra.mxu0 0
        %1163 = vmatprep.mubr.bf16.mxu0 0
        %1164 = vmatmul.mubr.bf16.gmra.mrb[0].mxu0 %v1129
        %v1165 = vpop.f32.mrb[0].mxu0
        %v1166 = vadd.f32 %v1113, %v1165
        %v1167 = vpop.f32.mrb[0].mxu0
        %v1168 = vpop.f32.mrb[0].mxu0
        %v1169 = vpop.f32.mrb[0].mxu0
        %1170 = vdwg.mxu0
        %v1171 = vmul.f32 %v1166, 0.35355338
        %1173 = vrot.lane.b32.xlu0 %v1171, 120
        %v1174 = vpop.permute.xlu0 %1173
        %1176 = vrot.lane.b32.xlu0 %v1171, 112
        %v1177 = vpop.permute.xlu0 %1176
        %1179 = vrot.lane.b32.xlu0 %v1171, 104
        %v1180 = vpop.permute.xlu0 %1179
        %v1182 = vcombine.low %v1171, %v1177
        %v1183 = vcombine.high %v1171, %v1177
        %v1185 = vunpack.c.l.s4 1983009808
        %v1186 = vunpack.c.0.s8 %v1185
        %v1187 = vlaneseq
        %v1188 = vshrl.u32 %v1187, 7
        %v1189 = vsub.s32 %v1186, %v1188
        %v1190 = vrot.slane %v1182, %v1189
        %v1192 = vunpack.c.l.s4 1983009808
        %v1193 = vunpack.c.0.s8 %v1192
        %v1194 = vlaneseq
        %v1195 = vshrl.u32 %v1194, 7
        %v1196 = vsub.s32 %v1193, %v1195
        %v1197 = vrot.slane %v1183, %v1196
        %v1198 = vcombine.low %v1174, %v1180
        %v1199 = vcombine.high %v1174, %v1180
        %v1201 = vunpack.c.l.s4 1983009808
        %v1202 = vunpack.c.0.s8 %v1201
        %v1203 = vlaneseq
        %v1204 = vshrl.u32 %v1203, 7
        %v1205 = vsub.s32 %v1202, %v1204
        %v1206 = vrot.slane %v1198, %v1205
        %v1208 = vunpack.c.l.s4 1983009808
        %v1209 = vunpack.c.0.s8 %v1208
        %v1210 = vlaneseq
        %v1211 = vshrl.u32 %v1210, 7
        %v1212 = vsub.s32 %v1209, %v1211
        %v1213 = vrot.slane %v1199, %v1212
        %v1214 = vcombine.low %v1190, %v1206
        %v1215 = vcombine.high %v1190, %v1206
        %v1217 = vunpack.c.l.s4 1934713408
        %v1218 = vunpack.c.0.s8 %v1217
        %v1219 = vlaneseq
        %v1220 = vshrl.u32 %v1219, 7
        %v1221 = vsub.s32 %v1218, %v1220
        %v1222 = vrot.slane %v1214, %v1221
        %v1224 = vunpack.c.l.s4 1934713408
        %v1225 = vunpack.c.0.s8 %v1224
        %v1226 = vlaneseq
        %v1227 = vshrl.u32 %v1226, 7
        %v1228 = vsub.s32 %v1225, %v1227
        %v1229 = vrot.slane %v1215, %v1228
        %v1230 = vcombine.low %v1197, %v1213
        %v1231 = vcombine.high %v1197, %v1213
        %v1233 = vunpack.c.l.s4 1934713408
        %v1234 = vunpack.c.0.s8 %v1233
        %v1235 = vlaneseq
        %v1236 = vshrl.u32 %v1235, 7
        %v1237 = vsub.s32 %v1234, %v1236
        %v1238 = vrot.slane %v1230, %v1237
        %v1240 = vunpack.c.l.s4 1934713408
        %v1241 = vunpack.c.0.s8 %v1240
        %v1242 = vlaneseq
        %v1243 = vshrl.u32 %v1242, 7
        %v1244 = vsub.s32 %v1241, %v1243
        %v1245 = vrot.slane %v1231, %v1244
        %v1246 = vcombine.high %v1222, 0.0
        %v1247 = vcombine.high %v1229, 0.0
        %v1248 = vcombine.high %v1238, 0.0
        %v1249 = vcombine.high %v1245, 0.0
        %v1250 = vcombine.low %v1222, %v1229
        %v1252 = vunpack.c.l.s4 1983009808
        %v1253 = vunpack.c.0.s8 %v1252
        %v1254 = vlaneseq
        %v1255 = vshrl.u32 %v1254, 7
        %v1256 = vsub.s32 %v1253, %v1255
        %v1257 = vrot.slane %v1250, %v1256
        %v1258 = vcombine.low %v1246, %v1247
        %v1260 = vunpack.c.l.s4 1983009808
        %v1261 = vunpack.c.0.s8 %v1260
        %v1262 = vlaneseq
        %v1263 = vshrl.u32 %v1262, 7
        %v1264 = vsub.s32 %v1261, %v1263
        %v1265 = vrot.slane %v1258, %v1264
        %v1266 = vcombine.low %v1238, %v1245
        %v1268 = vunpack.c.l.s4 1983009808
        %v1269 = vunpack.c.0.s8 %v1268
        %v1270 = vlaneseq
        %v1271 = vshrl.u32 %v1270, 7
        %v1272 = vsub.s32 %v1269, %v1271
        %v1273 = vrot.slane %v1266, %v1272
        %v1274 = vcombine.low %v1248, %v1249
        %v1276 = vunpack.c.l.s4 1983009808
        %v1277 = vunpack.c.0.s8 %v1276
        %v1278 = vlaneseq
        %v1279 = vshrl.u32 %v1278, 7
        %v1280 = vsub.s32 %v1277, %v1279
        %v1281 = vrot.slane %v1274, %v1280
        %v1282 = vcombine.low %v1257, %v1265
        %v1283 = vcombine.high %v1257, %v1265
        %v1285 = vunpack.c.l.s4 1934713408
        %v1286 = vunpack.c.0.s8 %v1285
        %v1287 = vlaneseq
        %v1288 = vshrl.u32 %v1287, 7
        %v1289 = vsub.s32 %v1286, %v1288
        %v1290 = vrot.slane %v1282, %v1289
        %v1292 = vunpack.c.l.s4 1934713408
        %v1293 = vunpack.c.0.s8 %v1292
        %v1294 = vlaneseq
        %v1295 = vshrl.u32 %v1294, 7
        %v1296 = vsub.s32 %v1293, %v1295
        %v1297 = vrot.slane %v1283, %v1296
        %v1298 = vcombine.low %v1273, %v1281
        %v1299 = vcombine.high %v1273, %v1281
        %v1301 = vunpack.c.l.s4 1934713408
        %v1302 = vunpack.c.0.s8 %v1301
        %v1303 = vlaneseq
        %v1304 = vshrl.u32 %v1303, 7
        %v1305 = vsub.s32 %v1302, %v1304
        %v1306 = vrot.slane %v1298, %v1305
        %v1308 = vunpack.c.l.s4 1934713408
        %v1309 = vunpack.c.0.s8 %v1308
        %v1310 = vlaneseq
        %v1311 = vshrl.u32 %v1310, 7
        %v1312 = vsub.s32 %v1309, %v1311
        %v1313 = vrot.slane %v1299, %v1312
        %v1314 = vcombine.low %v1290, %v1306
        %v1315 = vcombine.high %v1290, %v1306
        %v1316 = vcombine.low %v1297, %v1313
        %v1317 = vcombine.high %v1297, %v1313
        %v1318 = vpack.c.bf16 %v1314, %v1314
        %v1319 = vpack.c.bf16 %v1315, %v1315
        %v1320 = vpack.c.bf16 %v1316, %v1316
        %v1321 = vpack.c.bf16 %v1317, %v1317
        %v1322 = vld [vmem:[#allocation2] sm:$0xf]
        %v1323 = vld [vmem:[#allocation2 + $0x4] sm:$0xf]
        %v1324 = vld [vmem:[#allocation2 + $0x8] sm:$0xf]
        %v1325 = vld [vmem:[#allocation2 + $0xc] sm:$0xf]
        %vm1326 = vcmask 64512
        %v1328 = vsel %vm1326, %v1318, 0
        %v1331 = vsel %vm1326, %v1322, 0
        %1333 = vmatprep.subr.bf16.mxu0 0
        %1334 = vmatpush1.bf16.xpose.msra.mxu0 %v1331
        %1335 = vmatprep.subr.bf16.mxu0 0
        %1336 = vmatpush1.bf16.xpose.msra.mxu0 0
        %1337 = vmatprep.subr.bf16.mxu0 0
        %1338 = vmatpush1.bf16.xpose.msra.mxu0 0
        %1339 = vmatprep.subr.bf16.mxu0 0
        %1340 = vmatpush1.bf16.xpose.msra.mxu0 0
        %1341 = vmatprep.subr.bf16.mxu0 0
        %1342 = vmatpush1.bf16.xpose.msra.mxu0 0
        %1343 = vmatprep.subr.bf16.mxu0 0
        %1344 = vmatpush1.bf16.xpose.msra.mxu0 0
        %1345 = vmatprep.subr.bf16.mxu0 0
        %1346 = vmatpush1.bf16.xpose.msra.mxu0 0
        %1347 = vmatprep.subr.bf16.mxu0 0
        %1348 = vmatpush1.bf16.xpose.msra.mxu0 0
        %1349 = vmatprep.subr.bf16.mxu0 0
        %1350 = vmatpush1.bf16.xpose.msra.mxu0 0
        %1351 = vmatprep.subr.bf16.mxu0 0
        %1352 = vmatpush1.bf16.xpose.msra.mxu0 0
        %1353 = vmatprep.subr.bf16.mxu0 0
        %1354 = vmatpush1.bf16.xpose.msra.mxu0 0
        %1355 = vmatprep.subr.bf16.mxu0 0
        %1356 = vmatpush1.bf16.xpose.msra.mxu0 0
        %1357 = vmatprep.subr.bf16.mxu0 0
        %1358 = vmatpush1.bf16.xpose.msra.mxu0 0
        %1359 = vmatprep.subr.bf16.mxu0 0
        %1360 = vmatpush1.bf16.xpose.msra.mxu0 0
        %1361 = vmatprep.subr.bf16.mxu0 0
        %1362 = vmatpush1.bf16.xpose.msra.mxu0 0
        %1363 = vmatprep.subr.bf16.mxu0 0
        %1364 = vmatpush1.bf16.xpose.msra.mxu0 0
        %1365 = vmatprep.mubr.bf16.mxu0 0
        %1366 = vmatmul.mubr.bf16.gmra.mrb[0].mxu0 %v1328
        %v1367 = vpop.f32.mrb[0].mxu0
        %v1368 = vadd.f32 0.0, %v1367
        %v1369 = vpop.f32.mrb[0].mxu0
        %v1370 = vpop.f32.mrb[0].mxu0
        %v1371 = vpop.f32.mrb[0].mxu0
        %1372 = vdwg.mxu0
        %v1374 = vsel %vm1326, %v1319, 0
        %v1377 = vsel %vm1326, %v1323, 0
        %1379 = vmatprep.subr.bf16.mxu0 0
        %1380 = vmatpush1.bf16.xpose.msra.mxu0 %v1377
        %1381 = vmatprep.subr.bf16.mxu0 0
        %1382 = vmatpush1.bf16.xpose.msra.mxu0 0
        %1383 = vmatprep.subr.bf16.mxu0 0
        %1384 = vmatpush1.bf16.xpose.msra.mxu0 0
        %1385 = vmatprep.subr.bf16.mxu0 0
        %1386 = vmatpush1.bf16.xpose.msra.mxu0 0
        %1387 = vmatprep.subr.bf16.mxu0 0
        %1388 = vmatpush1.bf16.xpose.msra.mxu0 0
        %1389 = vmatprep.subr.bf16.mxu0 0
        %1390 = vmatpush1.bf16.xpose.msra.mxu0 0
        %1391 = vmatprep.subr.bf16.mxu0 0
        %1392 = vmatpush1.bf16.xpose.msra.mxu0 0
        %1393 = vmatprep.subr.bf16.mxu0 0
        %1394 = vmatpush1.bf16.xpose.msra.mxu0 0
        %1395 = vmatprep.subr.bf16.mxu0 0
        %1396 = vmatpush1.bf16.xpose.msra.mxu0 0
        %1397 = vmatprep.subr.bf16.mxu0 0
        %1398 = vmatpush1.bf16.xpose.msra.mxu0 0
        %1399 = vmatprep.subr.bf16.mxu0 0
        %1400 = vmatpush1.bf16.xpose.msra.mxu0 0
        %1401 = vmatprep.subr.bf16.mxu0 0
        %1402 = vmatpush1.bf16.xpose.msra.mxu0 0
        %1403 = vmatprep.subr.bf16.mxu0 0
        %1404 = vmatpush1.bf16.xpose.msra.mxu0 0
        %1405 = vmatprep.subr.bf16.mxu0 0
        %1406 = vmatpush1.bf16.xpose.msra.mxu0 0
        %1407 = vmatprep.subr.bf16.mxu0 0
        %1408 = vmatpush1.bf16.xpose.msra.mxu0 0
        %1409 = vmatprep.subr.bf16.mxu0 0
        %1410 = vmatpush1.bf16.xpose.msra.mxu0 0
        %1411 = vmatprep.mubr.bf16.mxu0 0
        %1412 = vmatmul.mubr.bf16.gmra.mrb[0].mxu0 %v1374
        %v1413 = vpop.f32.mrb[0].mxu0
        %v1414 = vadd.f32 0.0, %v1413
        %v1415 = vpop.f32.mrb[0].mxu0
        %v1416 = vpop.f32.mrb[0].mxu0
        %v1417 = vpop.f32.mrb[0].mxu0
        %1418 = vdwg.mxu0
        %v1420 = vsel %vm1326, %v1320, 0
        %v1423 = vsel %vm1326, %v1324, 0
        %1425 = vmatprep.subr.bf16.mxu0 0
        %1426 = vmatpush1.bf16.xpose.msra.mxu0 %v1423
        %1427 = vmatprep.subr.bf16.mxu0 0
        %1428 = vmatpush1.bf16.xpose.msra.mxu0 0
        %1429 = vmatprep.subr.bf16.mxu0 0
        %1430 = vmatpush1.bf16.xpose.msra.mxu0 0
        %1431 = vmatprep.subr.bf16.mxu0 0
        %1432 = vmatpush1.bf16.xpose.msra.mxu0 0
        %1433 = vmatprep.subr.bf16.mxu0 0
        %1434 = vmatpush1.bf16.xpose.msra.mxu0 0
        %1435 = vmatprep.subr.bf16.mxu0 0
        %1436 = vmatpush1.bf16.xpose.msra.mxu0 0
        %1437 = vmatprep.subr.bf16.mxu0 0
        %1438 = vmatpush1.bf16.xpose.msra.mxu0 0
        %1439 = vmatprep.subr.bf16.mxu0 0
        %1440 = vmatpush1.bf16.xpose.msra.mxu0 0
        %1441 = vmatprep.subr.bf16.mxu0 0
        %1442 = vmatpush1.bf16.xpose.msra.mxu0 0
        %1443 = vmatprep.subr.bf16.mxu0 0
        %1444 = vmatpush1.bf16.xpose.msra.mxu0 0
        %1445 = vmatprep.subr.bf16.mxu0 0
        %1446 = vmatpush1.bf16.xpose.msra.mxu0 0
        %1447 = vmatprep.subr.bf16.mxu0 0
        %1448 = vmatpush1.bf16.xpose.msra.mxu0 0
        %1449 = vmatprep.subr.bf16.mxu0 0
        %1450 = vmatpush1.bf16.xpose.msra.mxu0 0
        %1451 = vmatprep.subr.bf16.mxu0 0
        %1452 = vmatpush1.bf16.xpose.msra.mxu0 0
        %1453 = vmatprep.subr.bf16.mxu0 0
        %1454 = vmatpush1.bf16.xpose.msra.mxu0 0
        %1455 = vmatprep.subr.bf16.mxu0 0
        %1456 = vmatpush1.bf16.xpose.msra.mxu0 0
        %1457 = vmatprep.mubr.bf16.mxu0 0
        %1458 = vmatmul.mubr.bf16.gmra.mrb[0].mxu0 %v1420
        %v1459 = vpop.f32.mrb[0].mxu0
        %v1460 = vadd.f32 0.0, %v1459
        %v1461 = vpop.f32.mrb[0].mxu0
        %v1462 = vpop.f32.mrb[0].mxu0
        %v1463 = vpop.f32.mrb[0].mxu0
        %1464 = vdwg.mxu0
        %v1466 = vsel %vm1326, %v1321, 0
        %v1469 = vsel %vm1326, %v1325, 0
        %1471 = vmatprep.subr.bf16.mxu0 0
        %1472 = vmatpush1.bf16.xpose.msra.mxu0 %v1469
        %1473 = vmatprep.subr.bf16.mxu0 0
        %1474 = vmatpush1.bf16.xpose.msra.mxu0 0
        %1475 = vmatprep.subr.bf16.mxu0 0
        %1476 = vmatpush1.bf16.xpose.msra.mxu0 0
        %1477 = vmatprep.subr.bf16.mxu0 0
        %1478 = vmatpush1.bf16.xpose.msra.mxu0 0
        %1479 = vmatprep.subr.bf16.mxu0 0
        %1480 = vmatpush1.bf16.xpose.msra.mxu0 0
        %1481 = vmatprep.subr.bf16.mxu0 0
        %1482 = vmatpush1.bf16.xpose.msra.mxu0 0
        %1483 = vmatprep.subr.bf16.mxu0 0
        %1484 = vmatpush1.bf16.xpose.msra.mxu0 0
        %1485 = vmatprep.subr.bf16.mxu0 0
        %1486 = vmatpush1.bf16.xpose.msra.mxu0 0
        %1487 = vmatprep.subr.bf16.mxu0 0
        %1488 = vmatpush1.bf16.xpose.msra.mxu0 0
        %1489 = vmatprep.subr.bf16.mxu0 0
        %1490 = vmatpush1.bf16.xpose.msra.mxu0 0
        %1491 = vmatprep.subr.bf16.mxu0 0
        %1492 = vmatpush1.bf16.xpose.msra.mxu0 0
        %1493 = vmatprep.subr.bf16.mxu0 0
        %1494 = vmatpush1.bf16.xpose.msra.mxu0 0
        %1495 = vmatprep.subr.bf16.mxu0 0
        %1496 = vmatpush1.bf16.xpose.msra.mxu0 0
        %1497 = vmatprep.subr.bf16.mxu0 0
        %1498 = vmatpush1.bf16.xpose.msra.mxu0 0
        %1499 = vmatprep.subr.bf16.mxu0 0
        %1500 = vmatpush1.bf16.xpose.msra.mxu0 0
        %1501 = vmatprep.subr.bf16.mxu0 0
        %1502 = vmatpush1.bf16.xpose.msra.mxu0 0
        %1503 = vmatprep.mubr.bf16.mxu0 0
        %1504 = vmatmul.mubr.bf16.gmra.mrb[0].mxu0 %v1466
        %v1505 = vpop.f32.mrb[0].mxu0
        %v1506 = vadd.f32 0.0, %v1505
        %v1507 = vpop.f32.mrb[0].mxu0
        %v1508 = vpop.f32.mrb[0].mxu0
        %v1509 = vpop.f32.mrb[0].mxu0
        %1510 = vdwg.mxu0
        %v1511 = vsel %vm1326, %v1368, -inf
        %1512 = vmax.xlane.f32.xlu0 %v1511
        %v1513 = vpop.xlane.xlu0 %1512
        %v1514 = vsel %vm1326, %v1414, -inf
        %1515 = vmax.xlane.f32.xlu0 %v1514
        %v1516 = vpop.xlane.xlu0 %1515
        %v1517 = vsel %vm1326, %v1460, -inf
        %1518 = vmax.xlane.f32.xlu0 %v1517
        %v1519 = vpop.xlane.xlu0 %1518
        %v1520 = vsel %vm1326, %v1506, -inf
        %1521 = vmax.xlane.f32.xlu0 %v1520
        %v1522 = vpop.xlane.xlu0 %1521
        %v1523 = vsub.f32 %v1368, %v1513
        %v1524 = vsub.f32 %v1414, %v1516
        %v1525 = vsub.f32 %v1460, %v1519
        %v1526 = vsub.f32 %v1506, %v1522
        %v1527 = vmul.f32 %v1523, 1.442695
        %v1528 = vpow.pop %v1527
        %v1529 = vmul.f32 %v1524, 1.442695
        %v1530 = vpow.pop %v1529
        %v1531 = vmul.f32 %v1525, 1.442695
        %v1532 = vpow.pop %v1531
        %v1533 = vmul.f32 %v1526, 1.442695
        %v1534 = vpow.pop %v1533
        %v1535 = vsel %vm1326, %v1528, 0.0
        %1536 = vadd.xlane.f32.xlu0 %v1535
        %v1537 = vpop.xlane.xlu0 %1536
        %v1538 = vsel %vm1326, %v1530, 0.0
        %1539 = vadd.xlane.f32.xlu0 %v1538
        %v1540 = vpop.xlane.xlu0 %1539
        %v1541 = vsel %vm1326, %v1532, 0.0
        %1542 = vadd.xlane.f32.xlu0 %v1541
        %v1543 = vpop.xlane.xlu0 %1542
        %v1544 = vsel %vm1326, %v1534, 0.0
        %1545 = vadd.xlane.f32.xlu0 %v1544
        %v1546 = vpop.xlane.xlu0 %1545
        %v1547 = vrcp.pop %v1537
        %v1548 = vrcp.pop %v1540
        %v1549 = vrcp.pop %v1543
        %v1550 = vrcp.pop %v1546
        %v1551 = vmul.f32 %v1528, %v1547
        %v1552 = vmul.f32 %v1530, %v1548
        %v1553 = vmul.f32 %v1532, %v1549
        %v1554 = vmul.f32 %v1534, %v1550
        %v1555 = vpack.c.bf16 %v1551, %v1551
        %v1556 = vpack.c.bf16 %v1552, %v1552
        %v1557 = vpack.c.bf16 %v1553, %v1553
        %v1558 = vpack.c.bf16 %v1554, %v1554
        %v1559 = vld [vmem:[#allocation3] sm:$0xf]
        %v1560 = vld [vmem:[#allocation3 + $0x4] sm:$0xf]
        %v1561 = vld [vmem:[#allocation3 + $0x8] sm:$0xf]
        %v1562 = vld [vmem:[#allocation3 + $0xc] sm:$0xf]
        %v1564 = vsel %vm1326, %v1555, 0
        %vm1566 = vcmask 1043456
        %v1568 = vsel %vm1566, %v1559, 0
        %1570 = vmatprep.subr.bf16.mxu0 0
        %1571 = vmatpush1.bf16.msra.mxu0 %v1568
        %1572 = vmatprep.subr.bf16.mxu0 0
        %1573 = vmatpush1.bf16.msra.mxu0 0
        %1574 = vmatprep.subr.bf16.mxu0 0
        %1575 = vmatpush1.bf16.msra.mxu0 0
        %1576 = vmatprep.subr.bf16.mxu0 0
        %1577 = vmatpush1.bf16.msra.mxu0 0
        %1578 = vmatprep.subr.bf16.mxu0 0
        %1579 = vmatpush1.bf16.msra.mxu0 0
        %1580 = vmatprep.subr.bf16.mxu0 0
        %1581 = vmatpush1.bf16.msra.mxu0 0
        %1582 = vmatprep.subr.bf16.mxu0 0
        %1583 = vmatpush1.bf16.msra.mxu0 0
        %1584 = vmatprep.subr.bf16.mxu0 0
        %1585 = vmatpush1.bf16.msra.mxu0 0
        %1586 = vmatprep.subr.bf16.mxu0 0
        %1587 = vmatpush1.bf16.msra.mxu0 0
        %1588 = vmatprep.subr.bf16.mxu0 0
        %1589 = vmatpush1.bf16.msra.mxu0 0
        %1590 = vmatprep.subr.bf16.mxu0 0
        %1591 = vmatpush1.bf16.msra.mxu0 0
        %1592 = vmatprep.subr.bf16.mxu0 0
        %1593 = vmatpush1.bf16.msra.mxu0 0
        %1594 = vmatprep.subr.bf16.mxu0 0
        %1595 = vmatpush1.bf16.msra.mxu0 0
        %1596 = vmatprep.subr.bf16.mxu0 0
        %1597 = vmatpush1.bf16.msra.mxu0 0
        %1598 = vmatprep.subr.bf16.mxu0 0
        %1599 = vmatpush1.bf16.msra.mxu0 0
        %1600 = vmatprep.subr.bf16.mxu0 0
        %1601 = vmatpush1.bf16.msra.mxu0 0
        %1602 = vmatprep.mubr.bf16.mxu0 0
        %1603 = vmatmul.mubr.bf16.gmra.mrb[0].mxu0 %v1564
        %v1604 = vpop.f32.mrb[0].mxu0
        %v1605 = vadd.f32 0.0, %v1604
        %v1606 = vpop.f32.mrb[0].mxu0
        %v1607 = vpop.f32.mrb[0].mxu0
        %v1608 = vpop.f32.mrb[0].mxu0
        %1609 = vdwg.mxu0
        %v1611 = vsel %vm1326, %v1556, 0
        %v1614 = vsel %vm1566, %v1560, 0
        %1616 = vmatprep.subr.bf16.mxu0 0
        %1617 = vmatpush1.bf16.msra.mxu0 %v1614
        %1618 = vmatprep.subr.bf16.mxu0 0
        %1619 = vmatpush1.bf16.msra.mxu0 0
        %1620 = vmatprep.subr.bf16.mxu0 0
        %1621 = vmatpush1.bf16.msra.mxu0 0
        %1622 = vmatprep.subr.bf16.mxu0 0
        %1623 = vmatpush1.bf16.msra.mxu0 0
        %1624 = vmatprep.subr.bf16.mxu0 0
        %1625 = vmatpush1.bf16.msra.mxu0 0
        %1626 = vmatprep.subr.bf16.mxu0 0
        %1627 = vmatpush1.bf16.msra.mxu0 0
        %1628 = vmatprep.subr.bf16.mxu0 0
        %1629 = vmatpush1.bf16.msra.mxu0 0
        %1630 = vmatprep.subr.bf16.mxu0 0
        %1631 = vmatpush1.bf16.msra.mxu0 0
        %1632 = vmatprep.subr.bf16.mxu0 0
        %1633 = vmatpush1.bf16.msra.mxu0 0
        %1634 = vmatprep.subr.bf16.mxu0 0
        %1635 = vmatpush1.bf16.msra.mxu0 0
        %1636 = vmatprep.subr.bf16.mxu0 0
        %1637 = vmatpush1.bf16.msra.mxu0 0
        %1638 = vmatprep.subr.bf16.mxu0 0
        %1639 = vmatpush1.bf16.msra.mxu0 0
        %1640 = vmatprep.subr.bf16.mxu0 0
        %1641 = vmatpush1.bf16.msra.mxu0 0
        %1642 = vmatprep.subr.bf16.mxu0 0
        %1643 = vmatpush1.bf16.msra.mxu0 0
        %1644 = vmatprep.subr.bf16.mxu0 0
        %1645 = vmatpush1.bf16.msra.mxu0 0
        %1646 = vmatprep.subr.bf16.mxu0 0
        %1647 = vmatpush1.bf16.msra.mxu0 0
        %1648 = vmatprep.mubr.bf16.mxu0 0
        %1649 = vmatmul.mubr.bf16.gmra.mrb[0].mxu0 %v1611
        %v1650 = vpop.f32.mrb[0].mxu0
        %v1651 = vadd.f32 0.0, %v1650
        %v1652 = vpop.f32.mrb[0].mxu0
        %v1653 = vpop.f32.mrb[0].mxu0
        %v1654 = vpop.f32.mrb[0].mxu0
        %1655 = vdwg.mxu0
        %v1657 = vsel %vm1326, %v1557, 0
        %v1660 = vsel %vm1566, %v1561, 0
        %1662 = vmatprep.subr.bf16.mxu0 0
        %1663 = vmatpush1.bf16.msra.mxu0 %v1660
        %1664 = vmatprep.subr.bf16.mxu0 0
        %1665 = vmatpush1.bf16.msra.mxu0 0
        %1666 = vmatprep.subr.bf16.mxu0 0
        %1667 = vmatpush1.bf16.msra.mxu0 0
        %1668 = vmatprep.subr.bf16.mxu0 0
        %1669 = vmatpush1.bf16.msra.mxu0 0
        %1670 = vmatprep.subr.bf16.mxu0 0
        %1671 = vmatpush1.bf16.msra.mxu0 0
        %1672 = vmatprep.subr.bf16.mxu0 0
        %1673 = vmatpush1.bf16.msra.mxu0 0
        %1674 = vmatprep.subr.bf16.mxu0 0
        %1675 = vmatpush1.bf16.msra.mxu0 0
        %1676 = vmatprep.subr.bf16.mxu0 0
        %1677 = vmatpush1.bf16.msra.mxu0 0
        %1678 = vmatprep.subr.bf16.mxu0 0
        %1679 = vmatpush1.bf16.msra.mxu0 0
        %1680 = vmatprep.subr.bf16.mxu0 0
        %1681 = vmatpush1.bf16.msra.mxu0 0
        %1682 = vmatprep.subr.bf16.mxu0 0
        %1683 = vmatpush1.bf16.msra.mxu0 0
        %1684 = vmatprep.subr.bf16.mxu0 0
        %1685 = vmatpush1.bf16.msra.mxu0 0
        %1686 = vmatprep.subr.bf16.mxu0 0
        %1687 = vmatpush1.bf16.msra.mxu0 0
        %1688 = vmatprep.subr.bf16.mxu0 0
        %1689 = vmatpush1.bf16.msra.mxu0 0
        %1690 = vmatprep.subr.bf16.mxu0 0
        %1691 = vmatpush1.bf16.msra.mxu0 0
        %1692 = vmatprep.subr.bf16.mxu0 0
        %1693 = vmatpush1.bf16.msra.mxu0 0
        %1694 = vmatprep.mubr.bf16.mxu0 0
        %1695 = vmatmul.mubr.bf16.gmra.mrb[0].mxu0 %v1657
        %v1696 = vpop.f32.mrb[0].mxu0
        %v1697 = vadd.f32 0.0, %v1696
        %v1698 = vpop.f32.mrb[0].mxu0
        %v1699 = vpop.f32.mrb[0].mxu0
        %v1700 = vpop.f32.mrb[0].mxu0
        %1701 = vdwg.mxu0
        %v1703 = vsel %vm1326, %v1558, 0
        %v1706 = vsel %vm1566, %v1562, 0
        %1708 = vmatprep.subr.bf16.mxu0 0
        %1709 = vmatpush1.bf16.msra.mxu0 %v1706
        %1710 = vmatprep.subr.bf16.mxu0 0
        %1711 = vmatpush1.bf16.msra.mxu0 0
        %1712 = vmatprep.subr.bf16.mxu0 0
        %1713 = vmatpush1.bf16.msra.mxu0 0
        %1714 = vmatprep.subr.bf16.mxu0 0
        %1715 = vmatpush1.bf16.msra.mxu0 0
        %1716 = vmatprep.subr.bf16.mxu0 0
        %1717 = vmatpush1.bf16.msra.mxu0 0
        %1718 = vmatprep.subr.bf16.mxu0 0
        %1719 = vmatpush1.bf16.msra.mxu0 0
        %1720 = vmatprep.subr.bf16.mxu0 0
        %1721 = vmatpush1.bf16.msra.mxu0 0
        %1722 = vmatprep.subr.bf16.mxu0 0
        %1723 = vmatpush1.bf16.msra.mxu0 0
        %1724 = vmatprep.subr.bf16.mxu0 0
        %1725 = vmatpush1.bf16.msra.mxu0 0
        %1726 = vmatprep.subr.bf16.mxu0 0
        %1727 = vmatpush1.bf16.msra.mxu0 0
        %1728 = vmatprep.subr.bf16.mxu0 0
        %1729 = vmatpush1.bf16.msra.mxu0 0
        %1730 = vmatprep.subr.bf16.mxu0 0
        %1731 = vmatpush1.bf16.msra.mxu0 0
        %1732 = vmatprep.subr.bf16.mxu0 0
        %1733 = vmatpush1.bf16.msra.mxu0 0
        %1734 = vmatprep.subr.bf16.mxu0 0
        %1735 = vmatpush1.bf16.msra.mxu0 0
        %1736 = vmatprep.subr.bf16.mxu0 0
        %1737 = vmatpush1.bf16.msra.mxu0 0
        %1738 = vmatprep.subr.bf16.mxu0 0
        %1739 = vmatpush1.bf16.msra.mxu0 0
        %1740 = vmatprep.mubr.bf16.mxu0 0
        %1741 = vmatmul.mubr.bf16.gmra.mrb[0].mxu0 %v1703
        %v1742 = vpop.f32.mrb[0].mxu0
        %v1743 = vadd.f32 0.0, %v1742
        %v1744 = vpop.f32.mrb[0].mxu0
        %v1745 = vpop.f32.mrb[0].mxu0
        %v1746 = vpop.f32.mrb[0].mxu0
        %1747 = vdwg.mxu0
        %v1748 = vcombine.low %v1605, %v1697
        %v1749 = vcombine.high %v1605, %v1697
        %v1751 = vunpack.c.l.s4 1983009808
        %v1752 = vunpack.c.0.s8 %v1751
        %v1753 = vlaneseq
        %v1754 = vshrl.u32 %v1753, 7
        %v1755 = vsub.s32 %v1752, %v1754
        %v1756 = vrot.slane %v1748, %v1755
        %v1758 = vunpack.c.l.s4 1983009808
        %v1759 = vunpack.c.0.s8 %v1758
        %v1760 = vlaneseq
        %v1761 = vshrl.u32 %v1760, 7
        %v1762 = vsub.s32 %v1759, %v1761
        %v1763 = vrot.slane %v1749, %v1762
        %v1764 = vcombine.low %v1651, %v1743
        %v1765 = vcombine.high %v1651, %v1743
        %v1767 = vunpack.c.l.s4 1983009808
        %v1768 = vunpack.c.0.s8 %v1767
        %v1769 = vlaneseq
        %v1770 = vshrl.u32 %v1769, 7
        %v1771 = vsub.s32 %v1768, %v1770
        %v1772 = vrot.slane %v1764, %v1771
        %v1774 = vunpack.c.l.s4 1983009808
        %v1775 = vunpack.c.0.s8 %v1774
        %v1776 = vlaneseq
        %v1777 = vshrl.u32 %v1776, 7
        %v1778 = vsub.s32 %v1775, %v1777
        %v1779 = vrot.slane %v1765, %v1778
        %v1780 = vcombine.low %v1756, %v1772
        %v1781 = vcombine.high %v1756, %v1772
        %v1783 = vunpack.c.l.s4 1934713408
        %v1784 = vunpack.c.0.s8 %v1783
        %v1785 = vlaneseq
        %v1786 = vshrl.u32 %v1785, 7
        %v1787 = vsub.s32 %v1784, %v1786
        %v1788 = vrot.slane %v1780, %v1787
        %v1790 = vunpack.c.l.s4 1934713408
        %v1791 = vunpack.c.0.s8 %v1790
        %v1792 = vlaneseq
        %v1793 = vshrl.u32 %v1792, 7
        %v1794 = vsub.s32 %v1791, %v1793
        %v1795 = vrot.slane %v1781, %v1794
        %v1796 = vcombine.low %v1763, %v1779
        %v1797 = vcombine.high %v1763, %v1779
        %v1799 = vunpack.c.l.s4 1934713408
        %v1800 = vunpack.c.0.s8 %v1799
        %v1801 = vlaneseq
        %v1802 = vshrl.u32 %v1801, 7
        %v1803 = vsub.s32 %v1800, %v1802
        %v1804 = vrot.slane %v1796, %v1803
        %v1806 = vunpack.c.l.s4 1934713408
        %v1807 = vunpack.c.0.s8 %v1806
        %v1808 = vlaneseq
        %v1809 = vshrl.u32 %v1808, 7
        %v1810 = vsub.s32 %v1807, %v1809
        %v1811 = vrot.slane %v1797, %v1810
        %v1812 = vcombine.high %v1788, 0.0
        %v1813 = vcombine.high %v1795, 0.0
        %v1814 = vcombine.high %v1804, 0.0
        %v1815 = vcombine.high %v1811, 0.0
        %v1816 = vcombine.low %v1788, %v1795
        %v1818 = vunpack.c.l.s4 1983009808
        %v1819 = vunpack.c.0.s8 %v1818
        %v1820 = vlaneseq
        %v1821 = vshrl.u32 %v1820, 7
        %v1822 = vsub.s32 %v1819, %v1821
        %v1823 = vrot.slane %v1816, %v1822
        %v1824 = vcombine.low %v1812, %v1813
        %v1826 = vunpack.c.l.s4 1983009808
        %v1827 = vunpack.c.0.s8 %v1826
        %v1828 = vlaneseq
        %v1829 = vshrl.u32 %v1828, 7
        %v1830 = vsub.s32 %v1827, %v1829
        %v1831 = vrot.slane %v1824, %v1830
        %v1832 = vcombine.low %v1804, %v1811
        %v1834 = vunpack.c.l.s4 1983009808
        %v1835 = vunpack.c.0.s8 %v1834
        %v1836 = vlaneseq
        %v1837 = vshrl.u32 %v1836, 7
        %v1838 = vsub.s32 %v1835, %v1837
        %v1839 = vrot.slane %v1832, %v1838
        %v1840 = vcombine.low %v1814, %v1815
        %v1842 = vunpack.c.l.s4 1983009808
        %v1843 = vunpack.c.0.s8 %v1842
        %v1844 = vlaneseq
        %v1845 = vshrl.u32 %v1844, 7
        %v1846 = vsub.s32 %v1843, %v1845
        %v1847 = vrot.slane %v1840, %v1846
        %v1848 = vcombine.low %v1823, %v1831
        %v1849 = vcombine.high %v1823, %v1831
        %v1851 = vunpack.c.l.s4 1934713408
        %v1852 = vunpack.c.0.s8 %v1851
        %v1853 = vlaneseq
        %v1854 = vshrl.u32 %v1853, 7
        %v1855 = vsub.s32 %v1852, %v1854
        %v1856 = vrot.slane %v1848, %v1855
        %v1858 = vunpack.c.l.s4 1934713408
        %v1859 = vunpack.c.0.s8 %v1858
        %v1860 = vlaneseq
        %v1861 = vshrl.u32 %v1860, 7
        %v1862 = vsub.s32 %v1859, %v1861
        %v1863 = vrot.slane %v1849, %v1862
        %v1864 = vcombine.low %v1839, %v1847
        %v1865 = vcombine.high %v1839, %v1847
        %v1867 = vunpack.c.l.s4 1934713408
        %v1868 = vunpack.c.0.s8 %v1867
        %v1869 = vlaneseq
        %v1870 = vshrl.u32 %v1869, 7
        %v1871 = vsub.s32 %v1868, %v1870
        %v1872 = vrot.slane %v1864, %v1871
        %v1874 = vunpack.c.l.s4 1934713408
        %v1875 = vunpack.c.0.s8 %v1874
        %v1876 = vlaneseq
        %v1877 = vshrl.u32 %v1876, 7
        %v1878 = vsub.s32 %v1875, %v1877
        %v1879 = vrot.slane %v1865, %v1878
        %v1880 = vcombine.low %v1856, %v1872
        %v1881 = vcombine.high %v1856, %v1872
        %v1882 = vcombine.low %v1863, %v1879
        %v1883 = vcombine.high %v1863, %v1879
        %1885 = vrot.lane.b32.xlu0 %v1881, 8
        %v1886 = vpop.permute.xlu0 %1885
        %1889 = vrot.lane.b32.xlu0 %v1882, 16
        %v1890 = vpop.permute.xlu0 %1889
        %1893 = vrot.lane.b32.xlu0 %v1883, 24
        %v1894 = vpop.permute.xlu0 %1893
        %v1896 = vsel %vm1326, %v1880, %v1886
        %vm1897 = vcmask 130048
        %v1898 = vsel %vm1897, %v1896, %v1890
        %vm1899 = vcmask 195584
        %v1900 = vsel %vm1899, %v1898, %v1894
        %v1901 = vpack.c.bf16 %v1900, %v1900
        %v1902 = vld [vmem:[#allocation18] sm:$0xf]
        %v1903 = vld [vmem:[#allocation18 + $0x4] sm:$0xf]
        %v1904 = vld [vmem:[#allocation18 + $0x8] sm:$0xf]
        %v1905 = vld [vmem:[#allocation18 + $0xc] sm:$0xf]
        %v1906 = vld [vmem:[#allocation19] sm:$0x1]
        %v1908 = vlaneseq
        %v1909 = vshrl.u32 %v1908, 7
        %v1910 = vsub.s32 0, %v1909
        %v1911 = vrot.slane %v1906, %v1910
        %v1917 = vunpack.c.l.b16 %v1902
        %v1918 = vunpack.c.l.b16 %v1903
        %v1919 = vunpack.c.l.b16 %v1904
        %v1920 = vunpack.c.l.b16 %v1905
        %v1921 = vpack.c.b16 %v1918, %v1917
        %v1922 = vpack.c.b16 %v1920, %v1919
        %v1926 = vsel %vm1127, %v1901, 0
        %1928 = vmatprep.subr.bf16.mxu0 0
        %1929 = vmatpush1.bf16.msra.mxu0 %v1921
        %1930 = vmatprep.subr.bf16.mxu0 0
        %1931 = vmatpush1.bf16.msra.mxu0 %v1922
        %1932 = vmatprep.subr.bf16.mxu0 0
        %1933 = vmatpush1.bf16.msra.mxu0 0
        %1934 = vmatprep.subr.bf16.mxu0 0
        %1935 = vmatpush1.bf16.msra.mxu0 0
        %1936 = vmatprep.subr.bf16.mxu0 0
        %1937 = vmatpush1.bf16.msra.mxu0 0
        %1938 = vmatprep.subr.bf16.mxu0 0
        %1939 = vmatpush1.bf16.msra.mxu0 0
        %1940 = vmatprep.subr.bf16.mxu0 0
        %1941 = vmatpush1.bf16.msra.mxu0 0
        %1942 = vmatprep.subr.bf16.mxu0 0
        %1943 = vmatpush1.bf16.msra.mxu0 0
        %1944 = vmatprep.subr.bf16.mxu0 0
        %1945 = vmatpush1.bf16.msra.mxu0 0
        %1946 = vmatprep.subr.bf16.mxu0 0
        %1947 = vmatpush1.bf16.msra.mxu0 0
        %1948 = vmatprep.subr.bf16.mxu0 0
        %1949 = vmatpush1.bf16.msra.mxu0 0
        %1950 = vmatprep.subr.bf16.mxu0 0
        %1951 = vmatpush1.bf16.msra.mxu0 0
        %1952 = vmatprep.subr.bf16.mxu0 0
        %1953 = vmatpush1.bf16.msra.mxu0 0
        %1954 = vmatprep.subr.bf16.mxu0 0
        %1955 = vmatpush1.bf16.msra.mxu0 0
        %1956 = vmatprep.subr.bf16.mxu0 0
        %1957 = vmatpush1.bf16.msra.mxu0 0
        %1958 = vmatprep.subr.bf16.mxu0 0
        %1959 = vmatpush1.bf16.msra.mxu0 0
        %1960 = vmatprep.mubr.bf16.mxu0 0
        %1961 = vmatmul.mubr.bf16.gmra.mrb[0].mxu0 %v1926
        %v1962 = vpop.f32.mrb[0].mxu0
        %v1963 = vadd.f32 %v1911, %v1962
        %v1964 = vpop.f32.mrb[0].mxu0
        %v1965 = vpop.f32.mrb[0].mxu0
        %v1966 = vpop.f32.mrb[0].mxu0
        %1967 = vdwg.mxu0
        %v1968 = vadd.f32 %v1102, %v1963
        %v1969 = vsel %vm1127, %v1968, 0.0
        %1970 = vadd.xlane.f32.xlu0 %v1969
        %v1971 = vpop.xlane.xlu0 %1970
        %v1972 = vrcp.pop 32.0
        %v1973 = vmul.f32 %v1971, %v1972
        %v1974 = vsub.f32 %v1968, %v1973
        %v1975 = vmul.f32 %v1974, %v1974
        %v1976 = vsel %vm1127, %v1975, 0.0
        %1977 = vadd.xlane.f32.xlu0 %v1976
        %v1978 = vpop.xlane.xlu0 %1977
        %v1979 = vmul.f32 %v1978, %v1972
        %v1980 = vadd.f32 %v1979, 1e-05
        %v1981 = vrsqrt.pop %v1980
        %v1982 = vmul.f32 %v1974, %v1981
        %v1983 = vld [vmem:[#allocation21] sm:$0x1]
        %v1985 = vlaneseq
        %v1986 = vshrl.u32 %v1985, 7
        %v1987 = vsub.s32 0, %v1986
        %v1988 = vrot.slane %v1983, %v1987
        %v1990 = vmul.f32 %v1982, %v1988
        %v1991 = vld [vmem:[#allocation22] sm:$0x1]
        %v1993 = vlaneseq
        %v1994 = vshrl.u32 %v1993, 7
        %v1995 = vsub.s32 0, %v1994
        %v1996 = vrot.slane %v1991, %v1995
        %v1998 = vadd.f32 %v1990, %v1996
        %1999 = vst.msk [vmem:[%s648] sm:$0xff] %vm1127, %v1998
        %v2000 = vsel %vm1326, %v1551, 0.0
        %v2001 = vsel %vm1326, %v1552, 0.0
        %v2002 = vadd.f32 %v2000, %v2001
        %v2003 = vsel %vm1326, %v1553, 0.0
        %v2004 = vadd.f32 %v2002, %v2003
        %v2005 = vsel %vm1326, %v1554, 0.0
        %v2006 = vadd.f32 %v2004, %v2005
        %v2007 = vrcp.pop 4.0
        %v2008 = vmul.f32 %v2006, %v2007
        %2009 = vst.msk [vmem:[%s655] sm:$0xff] %vm1326, %v2008
        %s2010 = sand.u32 %s328, 1
        %s2011 = scalar_lea.sflag [#allocation6], %s2010
        %s2012 = sand.u32 %s328, 1
        %s2013 = smul.addr %s2012, 8
        %s2014 = scalar_lea.vmem [#allocation24], %s2013
        %s2015 = sand.u32 %s356, 1
        %s2016 = scalar_lea.sflag [#allocation26], %s2015
        %s2017 = sand.u32 %s356, 1
        %s2018 = smul.addr %s2017, 8
        %s2019 = scalar_lea.vmem [#allocation25], %s2018
        // Predicated region
        $region121: #{tpu_custom_call.1} parent=67 // pred_check
          %p2020 = pneg %p338
        $region122: #{tpu_custom_call.1} parent=67 // pred_check_branch
          %2022 = sbr.rel (%p2020) target = $region124
        $region123: #{tpu_custom_call.1} parent=67 // pred_region
          %s2024 = ssub.s32 128, 128
          %2025 = vsyncadd %s2011, %s2024
          %s2026 = sadd.s32 %s47, %s46
          %s2027 = smul.addr %s2026, 128
          %s2028 = scalar_lea.hbm %s12, %s2027
          %s2030 = sshll.u32 %s2014, 4
          %s2031 = int_to_ptr.vmem [resolvable:$true] %s2030
          %2033 = dma.vmem_to_hbm [thread:$0]  %s2031, 128, %s2028, %s2011
        $region124: #{tpu_custom_call.1} parent=67 // pred_fallthru
          _
        // Predicated region
        $region125: #{tpu_custom_call.1} parent=67 // pred_check
          %p2034 = pneg %p366
        $region126: #{tpu_custom_call.1} parent=67 // pred_check_branch
          %2036 = sbr.rel (%p2034) target = $region128
        $region127: #{tpu_custom_call.1} parent=67 // pred_region
          %s2038 = ssub.s32 128, 128
          %2039 = vsyncadd %s2016, %s2038
          %s2040 = sadd.s32 %s47, %s46
          %s2041 = smul.addr %s2040, 128
          %s2042 = scalar_lea.hbm %s13, %s2041
          %s2044 = sshll.u32 %s2019, 4
          %s2045 = int_to_ptr.vmem [resolvable:$true] %s2044
          %2047 = dma.vmem_to_hbm [thread:$0]  %s2045, 128, %s2042, %s2016
        $region128: #{tpu_custom_call.1} parent=67 // pred_fallthru
          _
      $region68: #{tpu_custom_call.1} parent=5 // pred_fallthru
        _
      %p2048 = scmp.le.s32.totalorder 2, %s37
      // Predicated region
      $region129: #{tpu_custom_call.1} parent=5 // pred_check
        %p2049 = pneg %p2048
      $region130: #{tpu_custom_call.1} parent=5 // pred_check_branch
        %2051 = sbr.rel (%p2049) target = $region132
      $region131: #{tpu_custom_call.1} parent=5 // pred_region
        %s2052 = ssub.s32 %s37, 2
        // Predicated region
        $region133: #{tpu_custom_call.1} parent=131 // pred_check
          %p2053 = pneg %p344
        $region134: #{tpu_custom_call.1} parent=131 // pred_check_branch
          %2055 = sbr.rel (%p2053) target = $region136
        $region135: #{tpu_custom_call.1} parent=131 // pred_region
          %s2056 = sand.u32 %s329, 1
          %s2057 = scalar_lea.sflag [#allocation6], %s2056
          %s2058 = sand.u32 %s329, 1
          %s2059 = smul.addr %s2058, 8
          %s2060 = scalar_lea.vmem [#allocation24], %s2059
          %2061 = dma.done %s2057, 128
        $region136: #{tpu_custom_call.1} parent=131 // pred_fallthru
          _
        // Predicated region
        $region137: #{tpu_custom_call.1} parent=131 // pred_check
          %p2062 = pneg %p372
        $region138: #{tpu_custom_call.1} parent=131 // pred_check_branch
          %2064 = sbr.rel (%p2062) target = $region140
        $region139: #{tpu_custom_call.1} parent=131 // pred_region
          %s2065 = sand.u32 %s357, 1
          %s2066 = scalar_lea.sflag [#allocation26], %s2065
          %s2067 = sand.u32 %s357, 1
          %s2068 = smul.addr %s2067, 8
          %s2069 = scalar_lea.vmem [#allocation25], %s2068
          %2070 = dma.done %s2066, 128
        $region140: #{tpu_custom_call.1} parent=131 // pred_fallthru
          _
      $region132: #{tpu_custom_call.1} parent=5 // pred_fallthru
        _
    $region6: #{tpu_custom_call.1} parent=1 // loop_footer
      %s41 = sadd.s32 1, %s37
    $region7: #{tpu_custom_call.1} parent=1 // loop_footer_branch
      %36 = sbr.rel target = $region3
    $region8: #{tpu_custom_call.1} parent=1 // loop_exit
      _
    %2071 = vsyncpa [#allocation5], 1
    %s2072 = scalar_lea.sflag [#allocation5], 1
    %2073 = vsyncpa %s2072, 1
    %2074 = vsyncpa [#allocation8], 1
    %s2075 = scalar_lea.sflag [#allocation8], 1
    %2076 = vsyncpa %s2075, 1
    %2077 = vsyncpa [#allocation11], 1
    %2078 = vsyncpa [#allocation14], 1
    %2079 = vsyncpa [#allocation17], 1
    %2080 = vsyncpa [#allocation20], 1
    %2081 = vsyncpa [#allocation23], 1
    %2082 = vsyncpa [#allocation6], 1
    %s2083 = scalar_lea.sflag [#allocation6], 1
    %2084 = vsyncpa %s2083, 1
    %2085 = vsyncpa [#allocation26], 1
    %s2086 = scalar_lea.sflag [#allocation26], 1
    %2087 = vsyncpa %s2086, 1

</llo_original>
